<compile_context>
chip_gen: v7x
topology: tpu7x:2x2x1
jax: 0.10.0
libtpu: 0.0.40
codegen_flags: <defaults>
</compile_context>

<pallas_src>
import functools

import jax
import jax.numpy as jnp
from jax.experimental import pallas as pl
from jax.experimental.pallas import tpu as pltpu


OUT_PAD = 128  # lane-dense output width (out last dim padded F=8 -> 128)


def _tree_sum(terms):
    """Balanced-tree sum (depth log2(n)) so the scheduler sees a short add chain."""
    while len(terms) > 1:
        nxt = [terms[i] + terms[i + 1] for i in range(0, len(terms) - 1, 2)]
        if len(terms) % 2:
            nxt.append(terms[-1])
        terms = nxt
    return terms[0]


# ----------------------------- Pallas kernel ------------------------------ #
def lstm_ad_kernel(x_ref, wih_ref, whh_ref, wfcb_ref, hc0_ref, out_ref):
    """Whole sequence in one invocation (the recurrence is inherently serial).

    Shapes (all f32, whole arrays resident in VMEM, gridless):
      x_ref    : (T, 6F+1)   input with trailing ones column (bias folding)
      wih_ref  : (6F+1, 4F)  [Wih^T ; b_ih+b_hh], gate order [i,f,o,g], g rows x2
      whh_ref  : (F, 4F)     Whh^T, gate order [i,f,o,g], g rows x2
      wfcb_ref : (F+1, 128)  [Wfc^T ; b_fc], zero-padded to 128 lanes
      hc0_ref  : (2, F)      row 0 = h0, row 1 = c0 of the second LSTM
      out_ref  : (T, 128)    valid data in [:, :F]
    """
    T = x_ref.shape[0]
    F = hc0_ref.shape[1]

    # (1) Batched input projection for all T steps in ONE MXU matmul.  Bias is
    #     folded in via the ones column / bias row, and the (T, 4F) result stays
    #     in vregs -- no scratch-VMEM store/load round trip before the loop.
    gx = jnp.dot(x_ref[...], wih_ref[...], preferred_element_type=jnp.float32)

    whh = whh_ref[...]                     # (F, 4F), loaded once, loop-invariant
    h = hc0_ref[0:1, :]                    # (1, F)
    c = hc0_ref[1:2, :]                    # (1, F)

    hs = []
    for t in range(T):                     # static unroll: full scheduling visibility
        # Recurrent GEMV h @ Whh^T done on the VPU as F broadcast-FMAs over the
        # 32-lane gate row (skips the per-step MXU weight push / fill / pop).
        terms = [gx[t:t + 1, :]]
        for k in range(F):
            terms.append(h[:, k:k + 1] * whh[k:k + 1, :])
        gates = _tree_sum(terms)           # (1, 4F), order [i, f, o, 2*g_pre]

        # One EUP pass: sigmoid over the whole gate vector.  The g gate's
        # pre-activation was doubled in the wrapper, so tanh(z) = 2*sigmoid(2z)-1.
        s = jax.nn.sigmoid(gates)
        i_g = s[:, 0 * F:1 * F]
        f_g = s[:, 1 * F:2 * F]
        o_g = s[:, 2 * F:3 * F]
        g_g = 2.0 * s[:, 3 * F:4 * F] - 1.0
        c = f_g * c + i_g * g_g
        h = o_g * jnp.tanh(c)              # second (and last) EUP push per step
        hs.append(h)

    # (2) Batched FC + sigmoid over all timesteps; single unmasked (T, 128) store.
    hmat = jnp.concatenate(hs, axis=0)                                   # (T, F)
    y = jnp.dot(hmat, wfcb_ref[0:F, :],
                preferred_element_type=jnp.float32) + wfcb_ref[F:F + 1, :]
    out_ref[...] = jax.nn.sigmoid(y)


# ------------------------------ JAX wrapper -------------------------------- #
@functools.partial(jax.jit, static_argnames=("feats",))
def lstm_ad_forward(x, wih2, whh2, b2, wfc, bfc, h2_0, c2_0, *, feats):
    """x: (T, 6*feats) f32  ->  (T, 1, feats) f32 (matches torch output)."""
    T = x.shape[0]
    F = feats

    def reorder_scale(w):
        # PyTorch stacks gate rows [i, f, g, o]; reorder to [i, f, o, g] and
        # pre-scale the g rows by 2 (for the tanh(z) = 2*sigmoid(2z) - 1 rewrite).
        i, f, g, o = jnp.split(w, 4, axis=0)
        return jnp.concatenate([i, f, o, 2.0 * g], axis=0)

    wih_r = reorder_scale(wih2)                                    # (4F, 6F)
    whh_t = reorder_scale(whh2).T                                  # (F, 4F)
    b_r = reorder_scale(b2.reshape(4, F)).reshape(1, 4 * F)        # (1, 4F)

    # Pack operands: bias folded into the input projection, FC weight+bias packed,
    # (h0, c0) packed -> 5 prologue DMAs instead of 8.
    x_aug = jnp.concatenate([x, jnp.ones((T, 1), jnp.float32)], axis=1)   # (T, 6F+1)
    wih_aug = jnp.concatenate([wih_r.T, b_r], axis=0)                     # (6F+1, 4F)
    wfcb = (jnp.zeros((F + 1, OUT_PAD), jnp.float32)
            .at[:F, :F].set(wfc.T)
            .at[F, :F].set(bfc[0]))                                       # (F+1, 128)
    hc0 = jnp.concatenate([h2_0, c2_0], axis=0)                           # (2, F)

    vmem = pl.BlockSpec(memory_space=pltpu.MemorySpace.VMEM)
    out = pl.pallas_call(
        lstm_ad_kernel,
        out_shape=jax.ShapeDtypeStruct((T, OUT_PAD), jnp.float32),
        in_specs=[vmem] * 5,
        out_specs=vmem,
    )(x_aug, wih_aug, whh_t, wfcb, hc0)

    return out[:, :F].reshape(T, 1, F)


# --------------------------- pure-JAX reference ----------------------------- #
# Full-fidelity reference: it still runs the first LSTM (64-wide) exactly like the
# PyTorch forward, proving that dropping it in the kernel is output-identical
# (its state never reaches the output path).
def reference_forward(x, params, h1_0, c1_0, h2_0, c2_0, feats):
    (wih1, whh1, b1, wih2, whh2, b2, wfc, bfc) = params
    H1 = whh1.shape[1]

    def cell(xt, h, c, wih, whh, b, hid):
        g = xt @ wih.T + h @ whh.T + b
        i = jax.nn.sigmoid(g[:, :hid])
        f = jax.nn.sigmoid(g[:, hid:2 * hid])
        gg = jnp.tanh(g[:, 2 * hid:3 * hid])
        o = jax.nn.sigmoid(g[:, 3 * hid:])
        c = f * c + i * gg
        h = o * jnp.tanh(c)
        return h, c

    h1, c1, h2, c2 = h1_0, c1_0, h2_0, c2_0
    ys = []
    for t in range(x.shape[0]):
        xt = x[t:t + 1]
        h1, c1 = cell(xt, h1, c1, wih1, whh1, b1, H1)
        h2, c2 = cell(xt, h2, c2, wih2, whh2, b2, feats)
        ys.append(jax.nn.sigmoid(h2 @ wfc.T + bfc))
    return jnp.stack(ys, axis=0)  # (T, 1, F)


# --------------------------------- main ------------------------------------ #
if __name__ == "__main__":
    feats = 8         # self.n_feats
    n_hidden = 64     # self.n_hidden
    T = 8             # sequence length (leading dim of x)
    in_dim = 6 * feats

    key = jax.random.PRNGKey(0)
    keys = jax.random.split(key, 16)

    def u(k, shape, scale):
        return jax.random.uniform(k, shape, jnp.float32, -scale, scale)

    s1 = 1.0 / jnp.sqrt(n_hidden)
    s2 = 1.0 / jnp.sqrt(feats)

    # nn.LSTM(6F, 64) parameters (only used by the reference; dead w.r.t. output)
    wih1 = u(keys[0], (4 * n_hidden, in_dim), s1)
    whh1 = u(keys[1], (4 * n_hidden, n_hidden), s1)
    b1 = (u(keys[2], (4 * n_hidden,), s1) + u(keys[3], (4 * n_hidden,), s1)).reshape(1, -1)
    # nn.LSTM(6F, F) parameters (biases pre-summed: b_ih + b_hh -> (1, 4F))
    wih2 = u(keys[4], (4 * feats, in_dim), s2)
    whh2 = u(keys[5], (4 * feats, feats), s2)
    b2 = (u(keys[6], (4 * feats,), s2) + u(keys[7], (4 * feats,), s2)).reshape(1, -1)
    # fcn = Linear(F, F) + Sigmoid
    wfc = u(keys[8], (feats, feats), s2)
    bfc = u(keys[9], (feats,), s2).reshape(1, -1)

    params = (wih1, whh1, b1, wih2, whh2, b2, wfc, bfc)

    # Initial states: torch.rand for h, torch.randn for c (deterministic here).
    h1_0 = jax.random.uniform(keys[10], (1, n_hidden), jnp.float32)
    c1_0 = jax.random.normal(keys[11], (1, n_hidden), jnp.float32)
    h2_0 = jax.random.uniform(keys[12], (1, feats), jnp.float32)
    c2_0 = jax.random.normal(keys[13], (1, feats), jnp.float32)

    # Input: each timestep flattens to 6*feats features (time-major).
    x = jax.random.normal(keys[14], (T, in_dim), jnp.float32)

    out = lstm_ad_forward(x, wih2, whh2, b2, wfc, bfc, h2_0, c2_0, feats=feats)
    out = jax.block_until_ready(out)

    ref = reference_forward(x, params, h1_0, c1_0, h2_0, c2_0, feats)
    assert out.shape == (T, 1, feats), out.shape
    assert jnp.allclose(out, ref, atol=1e-5, rtol=1e-5), "mismatch vs JAX reference"

    print("KERNEL_OK")
</pallas_src>

<mosaic_0001>
module attributes {stable_mosaic.version = 11 : i64} {
  func.func @lstm_ad_kernel(%arg0: memref<8x49xf32, #tpu.memory_space<vmem>>, %arg1: memref<49x32xf32, #tpu.memory_space<vmem>>, %arg2: memref<8x32xf32, #tpu.memory_space<vmem>>, %arg3: memref<9x128xf32, #tpu.memory_space<vmem>>, %arg4: memref<2x8xf32, #tpu.memory_space<vmem>>, %arg5: memref<8x128xf32, #tpu.memory_space<vmem>>) attributes {dimension_semantics = [], scalar_prefetch = 0 : i64, scratch_operands = 0 : i64, tpu.core_type = #tpu.core_type<tc>} {
    %c0 = arith.constant 0 : index
    %c0_0 = arith.constant 0 : index
    %0 = vector.load %arg0[%c0, %c0_0] : memref<8x49xf32, #tpu.memory_space<vmem>>, vector<8x49xf32>
    %c0_1 = arith.constant 0 : index
    %c0_2 = arith.constant 0 : index
    %1 = vector.load %arg1[%c0_1, %c0_2] : memref<49x32xf32, #tpu.memory_space<vmem>>, vector<49x32xf32>
    %cst = arith.constant dense<0.000000e+00> : vector<8x32xf32>
    %2 = tpu.matmul %0, %1, %cst {dimension_numbers = #tpu.dot_dimension_numbers<[1], [0], [0], [1], [0, 0, 1, 1], [], []>} : vector<8x49xf32>, vector<49x32xf32>, vector<8x32xf32> -> vector<8x32xf32>
    %c0_3 = arith.constant 0 : index
    %c0_4 = arith.constant 0 : index
    %3 = vector.load %arg2[%c0_3, %c0_4] : memref<8x32xf32, #tpu.memory_space<vmem>>, vector<8x32xf32>
    %c0_5 = arith.constant 0 : index
    %c0_6 = arith.constant 0 : index
    %4 = vector.load %arg4[%c0_5, %c0_6] : memref<2x8xf32, #tpu.memory_space<vmem>>, vector<1x8xf32>
    %c1 = arith.constant 1 : index
    %c0_7 = arith.constant 0 : index
    %5 = vector.load %arg4[%c1, %c0_7] : memref<2x8xf32, #tpu.memory_space<vmem>>, vector<1x8xf32>
    %6 = vector.extract_strided_slice %2 {offsets = [0, 0], sizes = [1, 32], strides = [1, 1]} : vector<8x32xf32> to vector<1x32xf32>
    %7 = vector.extract_strided_slice %4 {offsets = [0, 0], sizes = [1, 1], strides = [1, 1]} : vector<1x8xf32> to vector<1x1xf32>
    %8 = vector.extract_strided_slice %3 {offsets = [0, 0], sizes = [1, 32], strides = [1, 1]} : vector<8x32xf32> to vector<1x32xf32>
    %9 = vector.broadcast %7 : vector<1x1xf32> to vector<1x32xf32>
    %10 = arith.mulf %9, %8 : vector<1x32xf32>
    %11 = vector.extract_strided_slice %4 {offsets = [0, 1], sizes = [1, 1], strides = [1, 1]} : vector<1x8xf32> to vector<1x1xf32>
    %12 = vector.extract_strided_slice %3 {offsets = [1, 0], sizes = [1, 32], strides = [1, 1]} : vector<8x32xf32> to vector<1x32xf32>
    %13 = vector.broadcast %11 : vector<1x1xf32> to vector<1x32xf32>
    %14 = arith.mulf %13, %12 : vector<1x32xf32>
    %15 = vector.extract_strided_slice %4 {offsets = [0, 2], sizes = [1, 1], strides = [1, 1]} : vector<1x8xf32> to vector<1x1xf32>
    %16 = vector.extract_strided_slice %3 {offsets = [2, 0], sizes = [1, 32], strides = [1, 1]} : vector<8x32xf32> to vector<1x32xf32>
    %17 = vector.broadcast %15 : vector<1x1xf32> to vector<1x32xf32>
    %18 = arith.mulf %17, %16 : vector<1x32xf32>
    %19 = vector.extract_strided_slice %4 {offsets = [0, 3], sizes = [1, 1], strides = [1, 1]} : vector<1x8xf32> to vector<1x1xf32>
    %20 = vector.extract_strided_slice %3 {offsets = [3, 0], sizes = [1, 32], strides = [1, 1]} : vector<8x32xf32> to vector<1x32xf32>
    %21 = vector.broadcast %19 : vector<1x1xf32> to vector<1x32xf32>
    %22 = arith.mulf %21, %20 : vector<1x32xf32>
    %23 = vector.extract_strided_slice %4 {offsets = [0, 4], sizes = [1, 1], strides = [1, 1]} : vector<1x8xf32> to vector<1x1xf32>
    %24 = vector.extract_strided_slice %3 {offsets = [4, 0], sizes = [1, 32], strides = [1, 1]} : vector<8x32xf32> to vector<1x32xf32>
    %25 = vector.broadcast %23 : vector<1x1xf32> to vector<1x32xf32>
    %26 = arith.mulf %25, %24 : vector<1x32xf32>
    %27 = vector.extract_strided_slice %4 {offsets = [0, 5], sizes = [1, 1], strides = [1, 1]} : vector<1x8xf32> to vector<1x1xf32>
    %28 = vector.extract_strided_slice %3 {offsets = [5, 0], sizes = [1, 32], strides = [1, 1]} : vector<8x32xf32> to vector<1x32xf32>
    %29 = vector.broadcast %27 : vector<1x1xf32> to vector<1x32xf32>
    %30 = arith.mulf %29, %28 : vector<1x32xf32>
    %31 = vector.extract_strided_slice %4 {offsets = [0, 6], sizes = [1, 1], strides = [1, 1]} : vector<1x8xf32> to vector<1x1xf32>
    %32 = vector.extract_strided_slice %3 {offsets = [6, 0], sizes = [1, 32], strides = [1, 1]} : vector<8x32xf32> to vector<1x32xf32>
    %33 = vector.broadcast %31 : vector<1x1xf32> to vector<1x32xf32>
    %34 = arith.mulf %33, %32 : vector<1x32xf32>
    %35 = vector.extract_strided_slice %4 {offsets = [0, 7], sizes = [1, 1], strides = [1, 1]} : vector<1x8xf32> to vector<1x1xf32>
    %36 = vector.extract_strided_slice %3 {offsets = [7, 0], sizes = [1, 32], strides = [1, 1]} : vector<8x32xf32> to vector<1x32xf32>
    %37 = vector.broadcast %35 : vector<1x1xf32> to vector<1x32xf32>
    %38 = arith.mulf %37, %36 : vector<1x32xf32>
    %39 = arith.addf %6, %10 : vector<1x32xf32>
    %40 = arith.addf %14, %18 : vector<1x32xf32>
    %41 = arith.addf %22, %26 : vector<1x32xf32>
    %42 = arith.addf %30, %34 : vector<1x32xf32>
    %43 = arith.addf %39, %40 : vector<1x32xf32>
    %44 = arith.addf %41, %42 : vector<1x32xf32>
    %45 = arith.addf %43, %44 : vector<1x32xf32>
    %46 = arith.addf %45, %38 : vector<1x32xf32>
    %47 = arith.negf %46 : vector<1x32xf32>
    %48 = math.exp %47 : vector<1x32xf32>
    %cst_8 = arith.constant 1.000000e+00 : f32
    %49 = vector.broadcast %cst_8 : f32 to vector<1x32xf32>
    %50 = arith.addf %49, %48 : vector<1x32xf32>
    %51 = arith.divf %49, %50 : vector<1x32xf32>
    %52 = vector.extract_strided_slice %51 {offsets = [0, 0], sizes = [1, 8], strides = [1, 1]} : vector<1x32xf32> to vector<1x8xf32>
    %53 = vector.extract_strided_slice %51 {offsets = [0, 8], sizes = [1, 8], strides = [1, 1]} : vector<1x32xf32> to vector<1x8xf32>
    %54 = vector.extract_strided_slice %51 {offsets = [0, 16], sizes = [1, 8], strides = [1, 1]} : vector<1x32xf32> to vector<1x8xf32>
    %55 = vector.extract_strided_slice %51 {offsets = [0, 24], sizes = [1, 8], strides = [1, 1]} : vector<1x32xf32> to vector<1x8xf32>
    %cst_9 = arith.constant 2.000000e+00 : f32
    %56 = vector.broadcast %cst_9 : f32 to vector<1x8xf32>
    %57 = arith.mulf %56, %55 : vector<1x8xf32>
    %cst_10 = arith.constant 1.000000e+00 : f32
    %58 = vector.broadcast %cst_10 : f32 to vector<1x8xf32>
    %59 = arith.subf %57, %58 : vector<1x8xf32>
    %60 = arith.mulf %53, %5 : vector<1x8xf32>
    %61 = arith.mulf %52, %59 : vector<1x8xf32>
    %62 = arith.addf %60, %61 : vector<1x8xf32>
    %63 = math.tanh %62 : vector<1x8xf32>
    %64 = arith.mulf %54, %63 : vector<1x8xf32>
    %65 = vector.extract_strided_slice %2 {offsets = [1, 0], sizes = [1, 32], strides = [1, 1]} : vector<8x32xf32> to vector<1x32xf32>
    %66 = vector.extract_strided_slice %64 {offsets = [0, 0], sizes = [1, 1], strides = [1, 1]} : vector<1x8xf32> to vector<1x1xf32>
    %67 = vector.extract_strided_slice %3 {offsets = [0, 0], sizes = [1, 32], strides = [1, 1]} : vector<8x32xf32> to vector<1x32xf32>
    %68 = vector.broadcast %66 : vector<1x1xf32> to vector<1x32xf32>
    %69 = arith.mulf %68, %67 : vector<1x32xf32>
    %70 = vector.extract_strided_slice %64 {offsets = [0, 1], sizes = [1, 1], strides = [1, 1]} : vector<1x8xf32> to vector<1x1xf32>
    %71 = vector.extract_strided_slice %3 {offsets = [1, 0], sizes = [1, 32], strides = [1, 1]} : vector<8x32xf32> to vector<1x32xf32>
    %72 = vector.broadcast %70 : vector<1x1xf32> to vector<1x32xf32>
    %73 = arith.mulf %72, %71 : vector<1x32xf32>
    %74 = vector.extract_strided_slice %64 {offsets = [0, 2], sizes = [1, 1], strides = [1, 1]} : vector<1x8xf32> to vector<1x1xf32>
    %75 = vector.extract_strided_slice %3 {offsets = [2, 0], sizes = [1, 32], strides = [1, 1]} : vector<8x32xf32> to vector<1x32xf32>
    %76 = vector.broadcast %74 : vector<1x1xf32> to vector<1x32xf32>
    %77 = arith.mulf %76, %75 : vector<1x32xf32>
    %78 = vector.extract_strided_slice %64 {offsets = [0, 3], sizes = [1, 1], strides = [1, 1]} : vector<1x8xf32> to vector<1x1xf32>
    %79 = vector.extract_strided_slice %3 {offsets = [3, 0], sizes = [1, 32], strides = [1, 1]} : vector<8x32xf32> to vector<1x32xf32>
    %80 = vector.broadcast %78 : vector<1x1xf32> to vector<1x32xf32>
    %81 = arith.mulf %80, %79 : vector<1x32xf32>
    %82 = vector.extract_strided_slice %64 {offsets = [0, 4], sizes = [1, 1], strides = [1, 1]} : vector<1x8xf32> to vector<1x1xf32>
    %83 = vector.extract_strided_slice %3 {offsets = [4, 0], sizes = [1, 32], strides = [1, 1]} : vector<8x32xf32> to vector<1x32xf32>
    %84 = vector.broadcast %82 : vector<1x1xf32> to vector<1x32xf32>
    %85 = arith.mulf %84, %83 : vector<1x32xf32>
    %86 = vector.extract_strided_slice %64 {offsets = [0, 5], sizes = [1, 1], strides = [1, 1]} : vector<1x8xf32> to vector<1x1xf32>
    %87 = vector.extract_strided_slice %3 {offsets = [5, 0], sizes = [1, 32], strides = [1, 1]} : vector<8x32xf32> to vector<1x32xf32>
    %88 = vector.broadcast %86 : vector<1x1xf32> to vector<1x32xf32>
    %89 = arith.mulf %88, %87 : vector<1x32xf32>
    %90 = vector.extract_strided_slice %64 {offsets = [0, 6], sizes = [1, 1], strides = [1, 1]} : vector<1x8xf32> to vector<1x1xf32>
    %91 = vector.extract_strided_slice %3 {offsets = [6, 0], sizes = [1, 32], strides = [1, 1]} : vector<8x32xf32> to vector<1x32xf32>
    %92 = vector.broadcast %90 : vector<1x1xf32> to vector<1x32xf32>
    %93 = arith.mulf %92, %91 : vector<1x32xf32>
    %94 = vector.extract_strided_slice %64 {offsets = [0, 7], sizes = [1, 1], strides = [1, 1]} : vector<1x8xf32> to vector<1x1xf32>
    %95 = vector.extract_strided_slice %3 {offsets = [7, 0], sizes = [1, 32], strides = [1, 1]} : vector<8x32xf32> to vector<1x32xf32>
    %96 = vector.broadcast %94 : vector<1x1xf32> to vector<1x32xf32>
    %97 = arith.mulf %96, %95 : vector<1x32xf32>
    %98 = arith.addf %65, %69 : vector<1x32xf32>
    %99 = arith.addf %73, %77 : vector<1x32xf32>
    %100 = arith.addf %81, %85 : vector<1x32xf32>
    %101 = arith.addf %89, %93 : vector<1x32xf32>
    %102 = arith.addf %98, %99 : vector<1x32xf32>
    %103 = arith.addf %100, %101 : vector<1x32xf32>
    %104 = arith.addf %102, %103 : vector<1x32xf32>
    %105 = arith.addf %104, %97 : vector<1x32xf32>
    %106 = arith.negf %105 : vector<1x32xf32>
    %107 = math.exp %106 : vector<1x32xf32>
    %cst_11 = arith.constant 1.000000e+00 : f32
    %108 = vector.broadcast %cst_11 : f32 to vector<1x32xf32>
    %109 = arith.addf %108, %107 : vector<1x32xf32>
    %110 = arith.divf %108, %109 : vector<1x32xf32>
    %111 = vector.extract_strided_slice %110 {offsets = [0, 0], sizes = [1, 8], strides = [1, 1]} : vector<1x32xf32> to vector<1x8xf32>
    %112 = vector.extract_strided_slice %110 {offsets = [0, 8], sizes = [1, 8], strides = [1, 1]} : vector<1x32xf32> to vector<1x8xf32>
    %113 = vector.extract_strided_slice %110 {offsets = [0, 16], sizes = [1, 8], strides = [1, 1]} : vector<1x32xf32> to vector<1x8xf32>
    %114 = vector.extract_strided_slice %110 {offsets = [0, 24], sizes = [1, 8], strides = [1, 1]} : vector<1x32xf32> to vector<1x8xf32>
    %cst_12 = arith.constant 2.000000e+00 : f32
    %115 = vector.broadcast %cst_12 : f32 to vector<1x8xf32>
    %116 = arith.mulf %115, %114 : vector<1x8xf32>
    %cst_13 = arith.constant 1.000000e+00 : f32
    %117 = vector.broadcast %cst_13 : f32 to vector<1x8xf32>
    %118 = arith.subf %116, %117 : vector<1x8xf32>
    %119 = arith.mulf %112, %62 : vector<1x8xf32>
    %120 = arith.mulf %111, %118 : vector<1x8xf32>
    %121 = arith.addf %119, %120 : vector<1x8xf32>
    %122 = math.tanh %121 : vector<1x8xf32>
    %123 = arith.mulf %113, %122 : vector<1x8xf32>
    %124 = vector.extract_strided_slice %2 {offsets = [2, 0], sizes = [1, 32], strides = [1, 1]} : vector<8x32xf32> to vector<1x32xf32>
    %125 = vector.extract_strided_slice %123 {offsets = [0, 0], sizes = [1, 1], strides = [1, 1]} : vector<1x8xf32> to vector<1x1xf32>
    %126 = vector.extract_strided_slice %3 {offsets = [0, 0], sizes = [1, 32], strides = [1, 1]} : vector<8x32xf32> to vector<1x32xf32>
    %127 = vector.broadcast %125 : vector<1x1xf32> to vector<1x32xf32>
    %128 = arith.mulf %127, %126 : vector<1x32xf32>
    %129 = vector.extract_strided_slice %123 {offsets = [0, 1], sizes = [1, 1], strides = [1, 1]} : vector<1x8xf32> to vector<1x1xf32>
    %130 = vector.extract_strided_slice %3 {offsets = [1, 0], sizes = [1, 32], strides = [1, 1]} : vector<8x32xf32> to vector<1x32xf32>
    %131 = vector.broadcast %129 : vector<1x1xf32> to vector<1x32xf32>
    %132 = arith.mulf %131, %130 : vector<1x32xf32>
    %133 = vector.extract_strided_slice %123 {offsets = [0, 2], sizes = [1, 1], strides = [1, 1]} : vector<1x8xf32> to vector<1x1xf32>
    %134 = vector.extract_strided_slice %3 {offsets = [2, 0], sizes = [1, 32], strides = [1, 1]} : vector<8x32xf32> to vector<1x32xf32>
    %135 = vector.broadcast %133 : vector<1x1xf32> to vector<1x32xf32>
    %136 = arith.mulf %135, %134 : vector<1x32xf32>
    %137 = vector.extract_strided_slice %123 {offsets = [0, 3], sizes = [1, 1], strides = [1, 1]} : vector<1x8xf32> to vector<1x1xf32>
    %138 = vector.extract_strided_slice %3 {offsets = [3, 0], sizes = [1, 32], strides = [1, 1]} : vector<8x32xf32> to vector<1x32xf32>
    %139 = vector.broadcast %137 : vector<1x1xf32> to vector<1x32xf32>
    %140 = arith.mulf %139, %138 : vector<1x32xf32>
    %141 = vector.extract_strided_slice %123 {offsets = [0, 4], sizes = [1, 1], strides = [1, 1]} : vector<1x8xf32> to vector<1x1xf32>
    %142 = vector.extract_strided_slice %3 {offsets = [4, 0], sizes = [1, 32], strides = [1, 1]} : vector<8x32xf32> to vector<1x32xf32>
    %143 = vector.broadcast %141 : vector<1x1xf32> to vector<1x32xf32>
    %144 = arith.mulf %143, %142 : vector<1x32xf32>
    %145 = vector.extract_strided_slice %123 {offsets = [0, 5], sizes = [1, 1], strides = [1, 1]} : vector<1x8xf32> to vector<1x1xf32>
    %146 = vector.extract_strided_slice %3 {offsets = [5, 0], sizes = [1, 32], strides = [1, 1]} : vector<8x32xf32> to vector<1x32xf32>
    %147 = vector.broadcast %145 : vector<1x1xf32> to vector<1x32xf32>
    %148 = arith.mulf %147, %146 : vector<1x32xf32>
    %149 = vector.extract_strided_slice %123 {offsets = [0, 6], sizes = [1, 1], strides = [1, 1]} : vector<1x8xf32> to vector<1x1xf32>
    %150 = vector.extract_strided_slice %3 {offsets = [6, 0], sizes = [1, 32], strides = [1, 1]} : vector<8x32xf32> to vector<1x32xf32>
    %151 = vector.broadcast %149 : vector<1x1xf32> to vector<1x32xf32>
    %152 = arith.mulf %151, %150 : vector<1x32xf32>
    %153 = vector.extract_strided_slice %123 {offsets = [0, 7], sizes = [1, 1], strides = [1, 1]} : vector<1x8xf32> to vector<1x1xf32>
    %154 = vector.extract_strided_slice %3 {offsets = [7, 0], sizes = [1, 32], strides = [1, 1]} : vector<8x32xf32> to vector<1x32xf32>
    %155 = vector.broadcast %153 : vector<1x1xf32> to vector<1x32xf32>
    %156 = arith.mulf %155, %154 : vector<1x32xf32>
    %157 = arith.addf %124, %128 : vector<1x32xf32>
    %158 = arith.addf %132, %136 : vector<1x32xf32>
    %159 = arith.addf %140, %144 : vector<1x32xf32>
    %160 = arith.addf %148, %152 : vector<1x32xf32>
    %161 = arith.addf %157, %158 : vector<1x32xf32>
    %162 = arith.addf %159, %160 : vector<1x32xf32>
    %163 = arith.addf %161, %162 : vector<1x32xf32>
    %164 = arith.addf %163, %156 : vector<1x32xf32>
    %165 = arith.negf %164 : vector<1x32xf32>
    %166 = math.exp %165 : vector<1x32xf32>
    %cst_14 = arith.constant 1.000000e+00 : f32
    %167 = vector.broadcast %cst_14 : f32 to vector<1x32xf32>
    %168 = arith.addf %167, %166 : vector<1x32xf32>
    %169 = arith.divf %167, %168 : vector<1x32xf32>
    %170 = vector.extract_strided_slice %169 {offsets = [0, 0], sizes = [1, 8], strides = [1, 1]} : vector<1x32xf32> to vector<1x8xf32>
    %171 = vector.extract_strided_slice %169 {offsets = [0, 8], sizes = [1, 8], strides = [1, 1]} : vector<1x32xf32> to vector<1x8xf32>
    %172 = vector.extract_strided_slice %169 {offsets = [0, 16], sizes = [1, 8], strides = [1, 1]} : vector<1x32xf32> to vector<1x8xf32>
    %173 = vector.extract_strided_slice %169 {offsets = [0, 24], sizes = [1, 8], strides = [1, 1]} : vector<1x32xf32> to vector<1x8xf32>
    %cst_15 = arith.constant 2.000000e+00 : f32
    %174 = vector.broadcast %cst_15 : f32 to vector<1x8xf32>
    %175 = arith.mulf %174, %173 : vector<1x8xf32>
    %cst_16 = arith.constant 1.000000e+00 : f32
    %176 = vector.broadcast %cst_16 : f32 to vector<1x8xf32>
    %177 = arith.subf %175, %176 : vector<1x8xf32>
    %178 = arith.mulf %171, %121 : vector<1x8xf32>
    %179 = arith.mulf %170, %177 : vector<1x8xf32>
    %180 = arith.addf %178, %179 : vector<1x8xf32>
    %181 = math.tanh %180 : vector<1x8xf32>
    %182 = arith.mulf %172, %181 : vector<1x8xf32>
    %183 = vector.extract_strided_slice %2 {offsets = [3, 0], sizes = [1, 32], strides = [1, 1]} : vector<8x32xf32> to vector<1x32xf32>
    %184 = vector.extract_strided_slice %182 {offsets = [0, 0], sizes = [1, 1], strides = [1, 1]} : vector<1x8xf32> to vector<1x1xf32>
    %185 = vector.extract_strided_slice %3 {offsets = [0, 0], sizes = [1, 32], strides = [1, 1]} : vector<8x32xf32> to vector<1x32xf32>
    %186 = vector.broadcast %184 : vector<1x1xf32> to vector<1x32xf32>
    %187 = arith.mulf %186, %185 : vector<1x32xf32>
    %188 = vector.extract_strided_slice %182 {offsets = [0, 1], sizes = [1, 1], strides = [1, 1]} : vector<1x8xf32> to vector<1x1xf32>
    %189 = vector.extract_strided_slice %3 {offsets = [1, 0], sizes = [1, 32], strides = [1, 1]} : vector<8x32xf32> to vector<1x32xf32>
    %190 = vector.broadcast %188 : vector<1x1xf32> to vector<1x32xf32>
    %191 = arith.mulf %190, %189 : vector<1x32xf32>
    %192 = vector.extract_strided_slice %182 {offsets = [0, 2], sizes = [1, 1], strides = [1, 1]} : vector<1x8xf32> to vector<1x1xf32>
    %193 = vector.extract_strided_slice %3 {offsets = [2, 0], sizes = [1, 32], strides = [1, 1]} : vector<8x32xf32> to vector<1x32xf32>
    %194 = vector.broadcast %192 : vector<1x1xf32> to vector<1x32xf32>
    %195 = arith.mulf %194, %193 : vector<1x32xf32>
    %196 = vector.extract_strided_slice %182 {offsets = [0, 3], sizes = [1, 1], strides = [1, 1]} : vector<1x8xf32> to vector<1x1xf32>
    %197 = vector.extract_strided_slice %3 {offsets = [3, 0], sizes = [1, 32], strides = [1, 1]} : vector<8x32xf32> to vector<1x32xf32>
    %198 = vector.broadcast %196 : vector<1x1xf32> to vector<1x32xf32>
    %199 = arith.mulf %198, %197 : vector<1x32xf32>
    %200 = vector.extract_strided_slice %182 {offsets = [0, 4], sizes = [1, 1], strides = [1, 1]} : vector<1x8xf32> to vector<1x1xf32>
    %201 = vector.extract_strided_slice %3 {offsets = [4, 0], sizes = [1, 32], strides = [1, 1]} : vector<8x32xf32> to vector<1x32xf32>
    %202 = vector.broadcast %200 : vector<1x1xf32> to vector<1x32xf32>
    %203 = arith.mulf %202, %201 : vector<1x32xf32>
    %204 = vector.extract_strided_slice %182 {offsets = [0, 5], sizes = [1, 1], strides = [1, 1]} : vector<1x8xf32> to vector<1x1xf32>
    %205 = vector.extract_strided_slice %3 {offsets = [5, 0], sizes = [1, 32], strides = [1, 1]} : vector<8x32xf32> to vector<1x32xf32>
    %206 = vector.broadcast %204 : vector<1x1xf32> to vector<1x32xf32>
    %207 = arith.mulf %206, %205 : vector<1x32xf32>
    %208 = vector.extract_strided_slice %182 {offsets = [0, 6], sizes = [1, 1], strides = [1, 1]} : vector<1x8xf32> to vector<1x1xf32>
    %209 = vector.extract_strided_slice %3 {offsets = [6, 0], sizes = [1, 32], strides = [1, 1]} : vector<8x32xf32> to vector<1x32xf32>
    %210 = vector.broadcast %208 : vector<1x1xf32> to vector<1x32xf32>
    %211 = arith.mulf %210, %209 : vector<1x32xf32>
    %212 = vector.extract_strided_slice %182 {offsets = [0, 7], sizes = [1, 1], strides = [1, 1]} : vector<1x8xf32> to vector<1x1xf32>
    %213 = vector.extract_strided_slice %3 {offsets = [7, 0], sizes = [1, 32], strides = [1, 1]} : vector<8x32xf32> to vector<1x32xf32>
    %214 = vector.broadcast %212 : vector<1x1xf32> to vector<1x32xf32>
    %215 = arith.mulf %214, %213 : vector<1x32xf32>
    %216 = arith.addf %183, %187 : vector<1x32xf32>
    %217 = arith.addf %191, %195 : vector<1x32xf32>
    %218 = arith.addf %199, %203 : vector<1x32xf32>
    %219 = arith.addf %207, %211 : vector<1x32xf32>
    %220 = arith.addf %216, %217 : vector<1x32xf32>
    %221 = arith.addf %218, %219 : vector<1x32xf32>
    %222 = arith.addf %220, %221 : vector<1x32xf32>
    %223 = arith.addf %222, %215 : vector<1x32xf32>
    %224 = arith.negf %223 : vector<1x32xf32>
    %225 = math.exp %224 : vector<1x32xf32>
    %cst_17 = arith.constant 1.000000e+00 : f32
    %226 = vector.broadcast %cst_17 : f32 to vector<1x32xf32>
    %227 = arith.addf %226, %225 : vector<1x32xf32>
    %228 = arith.divf %226, %227 : vector<1x32xf32>
    %229 = vector.extract_strided_slice %228 {offsets = [0, 0], sizes = [1, 8], strides = [1, 1]} : vector<1x32xf32> to vector<1x8xf32>
    %230 = vector.extract_strided_slice %228 {offsets = [0, 8], sizes = [1, 8], strides = [1, 1]} : vector<1x32xf32> to vector<1x8xf32>
    %231 = vector.extract_strided_slice %228 {offsets = [0, 16], sizes = [1, 8], strides = [1, 1]} : vector<1x32xf32> to vector<1x8xf32>
    %232 = vector.extract_strided_slice %228 {offsets = [0, 24], sizes = [1, 8], strides = [1, 1]} : vector<1x32xf32> to vector<1x8xf32>
    %cst_18 = arith.constant 2.000000e+00 : f32
    %233 = vector.broadcast %cst_18 : f32 to vector<1x8xf32>
    %234 = arith.mulf %233, %232 : vector<1x8xf32>
    %cst_19 = arith.constant 1.000000e+00 : f32
    %235 = vector.broadcast %cst_19 : f32 to vector<1x8xf32>
    %236 = arith.subf %234, %235 : vector<1x8xf32>
    %237 = arith.mulf %230, %180 : vector<1x8xf32>
    %238 = arith.mulf %229, %236 : vector<1x8xf32>
    %239 = arith.addf %237, %238 : vector<1x8xf32>
    %240 = math.tanh %239 : vector<1x8xf32>
    %241 = arith.mulf %231, %240 : vector<1x8xf32>
    %242 = vector.extract_strided_slice %2 {offsets = [4, 0], sizes = [1, 32], strides = [1, 1]} : vector<8x32xf32> to vector<1x32xf32>
    %243 = vector.extract_strided_slice %241 {offsets = [0, 0], sizes = [1, 1], strides = [1, 1]} : vector<1x8xf32> to vector<1x1xf32>
    %244 = vector.extract_strided_slice %3 {offsets = [0, 0], sizes = [1, 32], strides = [1, 1]} : vector<8x32xf32> to vector<1x32xf32>
    %245 = vector.broadcast %243 : vector<1x1xf32> to vector<1x32xf32>
    %246 = arith.mulf %245, %244 : vector<1x32xf32>
    %247 = vector.extract_strided_slice %241 {offsets = [0, 1], sizes = [1, 1], strides = [1, 1]} : vector<1x8xf32> to vector<1x1xf32>
    %248 = vector.extract_strided_slice %3 {offsets = [1, 0], sizes = [1, 32], strides = [1, 1]} : vector<8x32xf32> to vector<1x32xf32>
    %249 = vector.broadcast %247 : vector<1x1xf32> to vector<1x32xf32>
    %250 = arith.mulf %249, %248 : vector<1x32xf32>
    %251 = vector.extract_strided_slice %241 {offsets = [0, 2], sizes = [1, 1], strides = [1, 1]} : vector<1x8xf32> to vector<1x1xf32>
    %252 = vector.extract_strided_slice %3 {offsets = [2, 0], sizes = [1, 32], strides = [1, 1]} : vector<8x32xf32> to vector<1x32xf32>
    %253 = vector.broadcast %251 : vector<1x1xf32> to vector<1x32xf32>
    %254 = arith.mulf %253, %252 : vector<1x32xf32>
    %255 = vector.extract_strided_slice %241 {offsets = [0, 3], sizes = [1, 1], strides = [1, 1]} : vector<1x8xf32> to vector<1x1xf32>
    %256 = vector.extract_strided_slice %3 {offsets = [3, 0], sizes = [1, 32], strides = [1, 1]} : vector<8x32xf32> to vector<1x32xf32>
    %257 = vector.broadcast %255 : vector<1x1xf32> to vector<1x32xf32>
    %258 = arith.mulf %257, %256 : vector<1x32xf32>
    %259 = vector.extract_strided_slice %241 {offsets = [0, 4], sizes = [1, 1], strides = [1, 1]} : vector<1x8xf32> to vector<1x1xf32>
    %260 = vector.extract_strided_slice %3 {offsets = [4, 0], sizes = [1, 32], strides = [1, 1]} : vector<8x32xf32> to vector<1x32xf32>
    %261 = vector.broadcast %259 : vector<1x1xf32> to vector<1x32xf32>
    %262 = arith.mulf %261, %260 : vector<1x32xf32>
    %263 = vector.extract_strided_slice %241 {offsets = [0, 5], sizes = [1, 1], strides = [1, 1]} : vector<1x8xf32> to vector<1x1xf32>
    %264 = vector.extract_strided_slice %3 {offsets = [5, 0], sizes = [1, 32], strides = [1, 1]} : vector<8x32xf32> to vector<1x32xf32>
    %265 = vector.broadcast %263 : vector<1x1xf32> to vector<1x32xf32>
    %266 = arith.mulf %265, %264 : vector<1x32xf32>
    %267 = vector.extract_strided_slice %241 {offsets = [0, 6], sizes = [1, 1], strides = [1, 1]} : vector<1x8xf32> to vector<1x1xf32>
    %268 = vector.extract_strided_slice %3 {offsets = [6, 0], sizes = [1, 32], strides = [1, 1]} : vector<8x32xf32> to vector<1x32xf32>
    %269 = vector.broadcast %267 : vector<1x1xf32> to vector<1x32xf32>
    %270 = arith.mulf %269, %268 : vector<1x32xf32>
    %271 = vector.extract_strided_slice %241 {offsets = [0, 7], sizes = [1, 1], strides = [1, 1]} : vector<1x8xf32> to vector<1x1xf32>
    %272 = vector.extract_strided_slice %3 {offsets = [7, 0], sizes = [1, 32], strides = [1, 1]} : vector<8x32xf32> to vector<1x32xf32>
    %273 = vector.broadcast %271 : vector<1x1xf32> to vector<1x32xf32>
    %274 = arith.mulf %273, %272 : vector<1x32xf32>
    %275 = arith.addf %242, %246 : vector<1x32xf32>
    %276 = arith.addf %250, %254 : vector<1x32xf32>
    %277 = arith.addf %258, %262 : vector<1x32xf32>
    %278 = arith.addf %266, %270 : vector<1x32xf32>
    %279 = arith.addf %275, %276 : vector<1x32xf32>
    %280 = arith.addf %277, %278 : vector<1x32xf32>
    %281 = arith.addf %279, %280 : vector<1x32xf32>
    %282 = arith.addf %281, %274 : vector<1x32xf32>
    %283 = arith.negf %282 : vector<1x32xf32>
    %284 = math.exp %283 : vector<1x32xf32>
    %cst_20 = arith.constant 1.000000e+00 : f32
    %285 = vector.broadcast %cst_20 : f32 to vector<1x32xf32>
    %286 = arith.addf %285, %284 : vector<1x32xf32>
    %287 = arith.divf %285, %286 : vector<1x32xf32>
    %288 = vector.extract_strided_slice %287 {offsets = [0, 0], sizes = [1, 8], strides = [1, 1]} : vector<1x32xf32> to vector<1x8xf32>
    %289 = vector.extract_strided_slice %287 {offsets = [0, 8], sizes = [1, 8], strides = [1, 1]} : vector<1x32xf32> to vector<1x8xf32>
    %290 = vector.extract_strided_slice %287 {offsets = [0, 16], sizes = [1, 8], strides = [1, 1]} : vector<1x32xf32> to vector<1x8xf32>
    %291 = vector.extract_strided_slice %287 {offsets = [0, 24], sizes = [1, 8], strides = [1, 1]} : vector<1x32xf32> to vector<1x8xf32>
    %cst_21 = arith.constant 2.000000e+00 : f32
    %292 = vector.broadcast %cst_21 : f32 to vector<1x8xf32>
    %293 = arith.mulf %292, %291 : vector<1x8xf32>
    %cst_22 = arith.constant 1.000000e+00 : f32
    %294 = vector.broadcast %cst_22 : f32 to vector<1x8xf32>
    %295 = arith.subf %293, %294 : vector<1x8xf32>
    %296 = arith.mulf %289, %239 : vector<1x8xf32>
    %297 = arith.mulf %288, %295 : vector<1x8xf32>
    %298 = arith.addf %296, %297 : vector<1x8xf32>
    %299 = math.tanh %298 : vector<1x8xf32>
    %300 = arith.mulf %290, %299 : vector<1x8xf32>
    %301 = vector.extract_strided_slice %2 {offsets = [5, 0], sizes = [1, 32], strides = [1, 1]} : vector<8x32xf32> to vector<1x32xf32>
    %302 = vector.extract_strided_slice %300 {offsets = [0, 0], sizes = [1, 1], strides = [1, 1]} : vector<1x8xf32> to vector<1x1xf32>
    %303 = vector.extract_strided_slice %3 {offsets = [0, 0], sizes = [1, 32], strides = [1, 1]} : vector<8x32xf32> to vector<1x32xf32>
    %304 = vector.broadcast %302 : vector<1x1xf32> to vector<1x32xf32>
    %305 = arith.mulf %304, %303 : vector<1x32xf32>
    %306 = vector.extract_strided_slice %300 {offsets = [0, 1], sizes = [1, 1], strides = [1, 1]} : vector<1x8xf32> to vector<1x1xf32>
    %307 = vector.extract_strided_slice %3 {offsets = [1, 0], sizes = [1, 32], strides = [1, 1]} : vector<8x32xf32> to vector<1x32xf32>
    %308 = vector.broadcast %306 : vector<1x1xf32> to vector<1x32xf32>
    %309 = arith.mulf %308, %307 : vector<1x32xf32>
    %310 = vector.extract_strided_slice %300 {offsets = [0, 2], sizes = [1, 1], strides = [1, 1]} : vector<1x8xf32> to vector<1x1xf32>
    %311 = vector.extract_strided_slice %3 {offsets = [2, 0], sizes = [1, 32], strides = [1, 1]} : vector<8x32xf32> to vector<1x32xf32>
    %312 = vector.broadcast %310 : vector<1x1xf32> to vector<1x32xf32>
    %313 = arith.mulf %312, %311 : vector<1x32xf32>
    %314 = vector.extract_strided_slice %300 {offsets = [0, 3], sizes = [1, 1], strides = [1, 1]} : vector<1x8xf32> to vector<1x1xf32>
    %315 = vector.extract_strided_slice %3 {offsets = [3, 0], sizes = [1, 32], strides = [1, 1]} : vector<8x32xf32> to vector<1x32xf32>
    %316 = vector.broadcast %314 : vector<1x1xf32> to vector<1x32xf32>
    %317 = arith.mulf %316, %315 : vector<1x32xf32>
    %318 = vector.extract_strided_slice %300 {offsets = [0, 4], sizes = [1, 1], strides = [1, 1]} : vector<1x8xf32> to vector<1x1xf32>
    %319 = vector.extract_strided_slice %3 {offsets = [4, 0], sizes = [1, 32], strides = [1, 1]} : vector<8x32xf32> to vector<1x32xf32>
    %320 = vector.broadcast %318 : vector<1x1xf32> to vector<1x32xf32>
    %321 = arith.mulf %320, %319 : vector<1x32xf32>
    %322 = vector.extract_strided_slice %300 {offsets = [0, 5], sizes = [1, 1], strides = [1, 1]} : vector<1x8xf32> to vector<1x1xf32>
    %323 = vector.extract_strided_slice %3 {offsets = [5, 0], sizes = [1, 32], strides = [1, 1]} : vector<8x32xf32> to vector<1x32xf32>
    %324 = vector.broadcast %322 : vector<1x1xf32> to vector<1x32xf32>
    %325 = arith.mulf %324, %323 : vector<1x32xf32>
    %326 = vector.extract_strided_slice %300 {offsets = [0, 6], sizes = [1, 1], strides = [1, 1]} : vector<1x8xf32> to vector<1x1xf32>
    %327 = vector.extract_strided_slice %3 {offsets = [6, 0], sizes = [1, 32], strides = [1, 1]} : vector<8x32xf32> to vector<1x32xf32>
    %328 = vector.broadcast %326 : vector<1x1xf32> to vector<1x32xf32>
    %329 = arith.mulf %328, %327 : vector<1x32xf32>
    %330 = vector.extract_strided_slice %300 {offsets = [0, 7], sizes = [1, 1], strides = [1, 1]} : vector<1x8xf32> to vector<1x1xf32>
    %331 = vector.extract_strided_slice %3 {offsets = [7, 0], sizes = [1, 32], strides = [1, 1]} : vector<8x32xf32> to vector<1x32xf32>
    %332 = vector.broadcast %330 : vector<1x1xf32> to vector<1x32xf32>
    %333 = arith.mulf %332, %331 : vector<1x32xf32>
    %334 = arith.addf %301, %305 : vector<1x32xf32>
    %335 = arith.addf %309, %313 : vector<1x32xf32>
    %336 = arith.addf %317, %321 : vector<1x32xf32>
    %337 = arith.addf %325, %329 : vector<1x32xf32>
    %338 = arith.addf %334, %335 : vector<1x32xf32>
    %339 = arith.addf %336, %337 : vector<1x32xf32>
    %340 = arith.addf %338, %339 : vector<1x32xf32>
    %341 = arith.addf %340, %333 : vector<1x32xf32>
    %342 = arith.negf %341 : vector<1x32xf32>
    %343 = math.exp %342 : vector<1x32xf32>
    %cst_23 = arith.constant 1.000000e+00 : f32
    %344 = vector.broadcast %cst_23 : f32 to vector<1x32xf32>
    %345 = arith.addf %344, %343 : vector<1x32xf32>
    %346 = arith.divf %344, %345 : vector<1x32xf32>
    %347 = vector.extract_strided_slice %346 {offsets = [0, 0], sizes = [1, 8], strides = [1, 1]} : vector<1x32xf32> to vector<1x8xf32>
    %348 = vector.extract_strided_slice %346 {offsets = [0, 8], sizes = [1, 8], strides = [1, 1]} : vector<1x32xf32> to vector<1x8xf32>
    %349 = vector.extract_strided_slice %346 {offsets = [0, 16], sizes = [1, 8], strides = [1, 1]} : vector<1x32xf32> to vector<1x8xf32>
    %350 = vector.extract_strided_slice %346 {offsets = [0, 24], sizes = [1, 8], strides = [1, 1]} : vector<1x32xf32> to vector<1x8xf32>
    %cst_24 = arith.constant 2.000000e+00 : f32
    %351 = vector.broadcast %cst_24 : f32 to vector<1x8xf32>
    %352 = arith.mulf %351, %350 : vector<1x8xf32>
    %cst_25 = arith.constant 1.000000e+00 : f32
    %353 = vector.broadcast %cst_25 : f32 to vector<1x8xf32>
    %354 = arith.subf %352, %353 : vector<1x8xf32>
    %355 = arith.mulf %348, %298 : vector<1x8xf32>
    %356 = arith.mulf %347, %354 : vector<1x8xf32>
    %357 = arith.addf %355, %356 : vector<1x8xf32>
    %358 = math.tanh %357 : vector<1x8xf32>
    %359 = arith.mulf %349, %358 : vector<1x8xf32>
    %360 = vector.extract_strided_slice %2 {offsets = [6, 0], sizes = [1, 32], strides = [1, 1]} : vector<8x32xf32> to vector<1x32xf32>
    %361 = vector.extract_strided_slice %359 {offsets = [0, 0], sizes = [1, 1], strides = [1, 1]} : vector<1x8xf32> to vector<1x1xf32>
    %362 = vector.extract_strided_slice %3 {offsets = [0, 0], sizes = [1, 32], strides = [1, 1]} : vector<8x32xf32> to vector<1x32xf32>
    %363 = vector.broadcast %361 : vector<1x1xf32> to vector<1x32xf32>
    %364 = arith.mulf %363, %362 : vector<1x32xf32>
    %365 = vector.extract_strided_slice %359 {offsets = [0, 1], sizes = [1, 1], strides = [1, 1]} : vector<1x8xf32> to vector<1x1xf32>
    %366 = vector.extract_strided_slice %3 {offsets = [1, 0], sizes = [1, 32], strides = [1, 1]} : vector<8x32xf32> to vector<1x32xf32>
    %367 = vector.broadcast %365 : vector<1x1xf32> to vector<1x32xf32>
    %368 = arith.mulf %367, %366 : vector<1x32xf32>
    %369 = vector.extract_strided_slice %359 {offsets = [0, 2], sizes = [1, 1], strides = [1, 1]} : vector<1x8xf32> to vector<1x1xf32>
    %370 = vector.extract_strided_slice %3 {offsets = [2, 0], sizes = [1, 32], strides = [1, 1]} : vector<8x32xf32> to vector<1x32xf32>
    %371 = vector.broadcast %369 : vector<1x1xf32> to vector<1x32xf32>
    %372 = arith.mulf %371, %370 : vector<1x32xf32>
    %373 = vector.extract_strided_slice %359 {offsets = [0, 3], sizes = [1, 1], strides = [1, 1]} : vector<1x8xf32> to vector<1x1xf32>
    %374 = vector.extract_strided_slice %3 {offsets = [3, 0], sizes = [1, 32], strides = [1, 1]} : vector<8x32xf32> to vector<1x32xf32>
    %375 = vector.broadcast %373 : vector<1x1xf32> to vector<1x32xf32>
    %376 = arith.mulf %375, %374 : vector<1x32xf32>
    %377 = vector.extract_strided_slice %359 {offsets = [0, 4], sizes = [1, 1], strides = [1, 1]} : vector<1x8xf32> to vector<1x1xf32>
    %378 = vector.extract_strided_slice %3 {offsets = [4, 0], sizes = [1, 32], strides = [1, 1]} : vector<8x32xf32> to vector<1x32xf32>
    %379 = vector.broadcast %377 : vector<1x1xf32> to vector<1x32xf32>
    %380 = arith.mulf %379, %378 : vector<1x32xf32>
    %381 = vector.extract_strided_slice %359 {offsets = [0, 5], sizes = [1, 1], strides = [1, 1]} : vector<1x8xf32> to vector<1x1xf32>
    %382 = vector.extract_strided_slice %3 {offsets = [5, 0], sizes = [1, 32], strides = [1, 1]} : vector<8x32xf32> to vector<1x32xf32>
    %383 = vector.broadcast %381 : vector<1x1xf32> to vector<1x32xf32>
    %384 = arith.mulf %383, %382 : vector<1x32xf32>
    %385 = vector.extract_strided_slice %359 {offsets = [0, 6], sizes = [1, 1], strides = [1, 1]} : vector<1x8xf32> to vector<1x1xf32>
    %386 = vector.extract_strided_slice %3 {offsets = [6, 0], sizes = [1, 32], strides = [1, 1]} : vector<8x32xf32> to vector<1x32xf32>
    %387 = vector.broadcast %385 : vector<1x1xf32> to vector<1x32xf32>
    %388 = arith.mulf %387, %386 : vector<1x32xf32>
    %389 = vector.extract_strided_slice %359 {offsets = [0, 7], sizes = [1, 1], strides = [1, 1]} : vector<1x8xf32> to vector<1x1xf32>
    %390 = vector.extract_strided_slice %3 {offsets = [7, 0], sizes = [1, 32], strides = [1, 1]} : vector<8x32xf32> to vector<1x32xf32>
    %391 = vector.broadcast %389 : vector<1x1xf32> to vector<1x32xf32>
    %392 = arith.mulf %391, %390 : vector<1x32xf32>
    %393 = arith.addf %360, %364 : vector<1x32xf32>
    %394 = arith.addf %368, %372 : vector<1x32xf32>
    %395 = arith.addf %376, %380 : vector<1x32xf32>
    %396 = arith.addf %384, %388 : vector<1x32xf32>
    %397 = arith.addf %393, %394 : vector<1x32xf32>
    %398 = arith.addf %395, %396 : vector<1x32xf32>
    %399 = arith.addf %397, %398 : vector<1x32xf32>
    %400 = arith.addf %399, %392 : vector<1x32xf32>
    %401 = arith.negf %400 : vector<1x32xf32>
    %402 = math.exp %401 : vector<1x32xf32>
    %cst_26 = arith.constant 1.000000e+00 : f32
    %403 = vector.broadcast %cst_26 : f32 to vector<1x32xf32>
    %404 = arith.addf %403, %402 : vector<1x32xf32>
    %405 = arith.divf %403, %404 : vector<1x32xf32>
    %406 = vector.extract_strided_slice %405 {offsets = [0, 0], sizes = [1, 8], strides = [1, 1]} : vector<1x32xf32> to vector<1x8xf32>
    %407 = vector.extract_strided_slice %405 {offsets = [0, 8], sizes = [1, 8], strides = [1, 1]} : vector<1x32xf32> to vector<1x8xf32>
    %408 = vector.extract_strided_slice %405 {offsets = [0, 16], sizes = [1, 8], strides = [1, 1]} : vector<1x32xf32> to vector<1x8xf32>
    %409 = vector.extract_strided_slice %405 {offsets = [0, 24], sizes = [1, 8], strides = [1, 1]} : vector<1x32xf32> to vector<1x8xf32>
    %cst_27 = arith.constant 2.000000e+00 : f32
    %410 = vector.broadcast %cst_27 : f32 to vector<1x8xf32>
    %411 = arith.mulf %410, %409 : vector<1x8xf32>
    %cst_28 = arith.constant 1.000000e+00 : f32
    %412 = vector.broadcast %cst_28 : f32 to vector<1x8xf32>
    %413 = arith.subf %411, %412 : vector<1x8xf32>
    %414 = arith.mulf %407, %357 : vector<1x8xf32>
    %415 = arith.mulf %406, %413 : vector<1x8xf32>
    %416 = arith.addf %414, %415 : vector<1x8xf32>
    %417 = math.tanh %416 : vector<1x8xf32>
    %418 = arith.mulf %408, %417 : vector<1x8xf32>
    %419 = vector.extract_strided_slice %2 {offsets = [7, 0], sizes = [1, 32], strides = [1, 1]} : vector<8x32xf32> to vector<1x32xf32>
    %420 = vector.extract_strided_slice %418 {offsets = [0, 0], sizes = [1, 1], strides = [1, 1]} : vector<1x8xf32> to vector<1x1xf32>
    %421 = vector.extract_strided_slice %3 {offsets = [0, 0], sizes = [1, 32], strides = [1, 1]} : vector<8x32xf32> to vector<1x32xf32>
    %422 = vector.broadcast %420 : vector<1x1xf32> to vector<1x32xf32>
    %423 = arith.mulf %422, %421 : vector<1x32xf32>
    %424 = vector.extract_strided_slice %418 {offsets = [0, 1], sizes = [1, 1], strides = [1, 1]} : vector<1x8xf32> to vector<1x1xf32>
    %425 = vector.extract_strided_slice %3 {offsets = [1, 0], sizes = [1, 32], strides = [1, 1]} : vector<8x32xf32> to vector<1x32xf32>
    %426 = vector.broadcast %424 : vector<1x1xf32> to vector<1x32xf32>
    %427 = arith.mulf %426, %425 : vector<1x32xf32>
    %428 = vector.extract_strided_slice %418 {offsets = [0, 2], sizes = [1, 1], strides = [1, 1]} : vector<1x8xf32> to vector<1x1xf32>
    %429 = vector.extract_strided_slice %3 {offsets = [2, 0], sizes = [1, 32], strides = [1, 1]} : vector<8x32xf32> to vector<1x32xf32>
    %430 = vector.broadcast %428 : vector<1x1xf32> to vector<1x32xf32>
    %431 = arith.mulf %430, %429 : vector<1x32xf32>
    %432 = vector.extract_strided_slice %418 {offsets = [0, 3], sizes = [1, 1], strides = [1, 1]} : vector<1x8xf32> to vector<1x1xf32>
    %433 = vector.extract_strided_slice %3 {offsets = [3, 0], sizes = [1, 32], strides = [1, 1]} : vector<8x32xf32> to vector<1x32xf32>
    %434 = vector.broadcast %432 : vector<1x1xf32> to vector<1x32xf32>
    %435 = arith.mulf %434, %433 : vector<1x32xf32>
    %436 = vector.extract_strided_slice %418 {offsets = [0, 4], sizes = [1, 1], strides = [1, 1]} : vector<1x8xf32> to vector<1x1xf32>
    %437 = vector.extract_strided_slice %3 {offsets = [4, 0], sizes = [1, 32], strides = [1, 1]} : vector<8x32xf32> to vector<1x32xf32>
    %438 = vector.broadcast %436 : vector<1x1xf32> to vector<1x32xf32>
    %439 = arith.mulf %438, %437 : vector<1x32xf32>
    %440 = vector.extract_strided_slice %418 {offsets = [0, 5], sizes = [1, 1], strides = [1, 1]} : vector<1x8xf32> to vector<1x1xf32>
    %441 = vector.extract_strided_slice %3 {offsets = [5, 0], sizes = [1, 32], strides = [1, 1]} : vector<8x32xf32> to vector<1x32xf32>
    %442 = vector.broadcast %440 : vector<1x1xf32> to vector<1x32xf32>
    %443 = arith.mulf %442, %441 : vector<1x32xf32>
    %444 = vector.extract_strided_slice %418 {offsets = [0, 6], sizes = [1, 1], strides = [1, 1]} : vector<1x8xf32> to vector<1x1xf32>
    %445 = vector.extract_strided_slice %3 {offsets = [6, 0], sizes = [1, 32], strides = [1, 1]} : vector<8x32xf32> to vector<1x32xf32>
    %446 = vector.broadcast %444 : vector<1x1xf32> to vector<1x32xf32>
    %447 = arith.mulf %446, %445 : vector<1x32xf32>
    %448 = vector.extract_strided_slice %418 {offsets = [0, 7], sizes = [1, 1], strides = [1, 1]} : vector<1x8xf32> to vector<1x1xf32>
    %449 = vector.extract_strided_slice %3 {offsets = [7, 0], sizes = [1, 32], strides = [1, 1]} : vector<8x32xf32> to vector<1x32xf32>
    %450 = vector.broadcast %448 : vector<1x1xf32> to vector<1x32xf32>
    %451 = arith.mulf %450, %449 : vector<1x32xf32>
    %452 = arith.addf %419, %423 : vector<1x32xf32>
    %453 = arith.addf %427, %431 : vector<1x32xf32>
    %454 = arith.addf %435, %439 : vector<1x32xf32>
    %455 = arith.addf %443, %447 : vector<1x32xf32>
    %456 = arith.addf %452, %453 : vector<1x32xf32>
    %457 = arith.addf %454, %455 : vector<1x32xf32>
    %458 = arith.addf %456, %457 : vector<1x32xf32>
    %459 = arith.addf %458, %451 : vector<1x32xf32>
    %460 = arith.negf %459 : vector<1x32xf32>
    %461 = math.exp %460 : vector<1x32xf32>
    %cst_29 = arith.constant 1.000000e+00 : f32
    %462 = vector.broadcast %cst_29 : f32 to vector<1x32xf32>
    %463 = arith.addf %462, %461 : vector<1x32xf32>
    %464 = arith.divf %462, %463 : vector<1x32xf32>
    %465 = vector.extract_strided_slice %464 {offsets = [0, 0], sizes = [1, 8], strides = [1, 1]} : vector<1x32xf32> to vector<1x8xf32>
    %466 = vector.extract_strided_slice %464 {offsets = [0, 8], sizes = [1, 8], strides = [1, 1]} : vector<1x32xf32> to vector<1x8xf32>
    %467 = vector.extract_strided_slice %464 {offsets = [0, 16], sizes = [1, 8], strides = [1, 1]} : vector<1x32xf32> to vector<1x8xf32>
    %468 = vector.extract_strided_slice %464 {offsets = [0, 24], sizes = [1, 8], strides = [1, 1]} : vector<1x32xf32> to vector<1x8xf32>
    %cst_30 = arith.constant 2.000000e+00 : f32
    %469 = vector.broadcast %cst_30 : f32 to vector<1x8xf32>
    %470 = arith.mulf %469, %468 : vector<1x8xf32>
    %cst_31 = arith.constant 1.000000e+00 : f32
    %471 = vector.broadcast %cst_31 : f32 to vector<1x8xf32>
    %472 = arith.subf %470, %471 : vector<1x8xf32>
    %473 = arith.mulf %466, %416 : vector<1x8xf32>
    %474 = arith.mulf %465, %472 : vector<1x8xf32>
    %475 = arith.addf %473, %474 : vector<1x8xf32>
    %476 = math.tanh %475 : vector<1x8xf32>
    %477 = arith.mulf %467, %476 : vector<1x8xf32>
    %478 = tpu.concatenate %64, %123, %182, %241, %300, %359, %418, %477 in 0 : vector<1x8xf32>, vector<1x8xf32>, vector<1x8xf32>, vector<1x8xf32>, vector<1x8xf32>, vector<1x8xf32>, vector<1x8xf32>, vector<1x8xf32> -> vector<8x8xf32>
    %c0_32 = arith.constant 0 : index
    %c0_33 = arith.constant 0 : index
    %479 = vector.load %arg3[%c0_32, %c0_33] : memref<9x128xf32, #tpu.memory_space<vmem>>, vector<8x128xf32>
    %cst_34 = arith.constant dense<0.000000e+00> : vector<8x128xf32>
    %480 = tpu.matmul %478, %479, %cst_34 {dimension_numbers = #tpu.dot_dimension_numbers<[1], [0], [0], [1], [0, 0, 1, 1], [], []>} : vector<8x8xf32>, vector<8x128xf32>, vector<8x128xf32> -> vector<8x128xf32>
    %c8 = arith.constant 8 : index
    %c0_35 = arith.constant 0 : index
    %481 = vector.load %arg3[%c8, %c0_35] : memref<9x128xf32, #tpu.memory_space<vmem>>, vector<1x128xf32>
    %482 = vector.broadcast %481 : vector<1x128xf32> to vector<8x128xf32>
    %483 = arith.addf %480, %482 : vector<8x128xf32>
    %484 = arith.negf %483 : vector<8x128xf32>
    %485 = math.exp %484 : vector<8x128xf32>
    %cst_36 = arith.constant 1.000000e+00 : f32
    %486 = vector.broadcast %cst_36 : f32 to vector<8x128xf32>
    %487 = arith.addf %486, %485 : vector<8x128xf32>
    %488 = arith.divf %486, %487 : vector<8x128xf32>
    %c0_37 = arith.constant 0 : index
    %c0_38 = arith.constant 0 : index
    %489 = vector.load %arg5[%c0_37, %c0_38] : memref<8x128xf32, #tpu.memory_space<vmem>>, vector<8x128xf32>
    tpu.vector_store %arg5[%c0_37, %c0_38], %488 {strides = array<i32>} : memref<8x128xf32, #tpu.memory_space<vmem>>, vector<8x128xf32>,
    return
  }
}

</mosaic_0001>

<llo_original>
// kernel: lstm_ad_forward.1
$region0: #{lstm_ad_forward.1}
  #allocation0 [shape = 'u32[]', space=smem, size = 0x4, offset = 0x4, fixed_abs, tag = 'smem constant byte address 0x4 - core index']
  #allocation1 [shape = 'u32[144,128]{1,0:T(1,128)}', space=vmem, size = 0x12000, scoped, tag = 'internal scratch']
  %s0 = inlined_call_operand.vmem [shape: f32[8,49], index: 0, kind: input, shape index: {}]
  %s1 = inlined_call_operand.vmem [shape: f32[49,32], index: 1, kind: input, shape index: {}]
  %s2 = inlined_call_operand.vmem [shape: f32[8,32], index: 2, kind: input, shape index: {}]
  %s3 = inlined_call_operand.vmem [shape: f32[9,128], index: 3, kind: input, shape index: {}]
  %s4 = inlined_call_operand.vmem [shape: f32[2,8], index: 4, kind: input, shape index: {}]
  %s5 = inlined_call_operand.hbm [shape: f32[8,128], index: 5, kind: output, shape index: {}]
  %s6 = sld [smem:[#allocation0]]
  $region30: #{lstm_ad_forward.1} parent=0
    _
  %s8 = ssub.s32 1, %s6
  %s9 = scalar_select 0, %s8, %s6
  $region1: #{lstm_ad_forward.1} parent=0
    #allocation2 [shape = 'u8[4096]{0}', space=vmem, size = 0x1000, scoped, tag = 'output window, operand 0, single buffered']
    #allocation3 [shape = 's32[1]{0}', space=sflag, size = 0x4, scoped, tag = 'scoped memory for lstm_ad_forward.1']
    %10 = vsyncpa [#allocation3], 0
    // Predicated region
    $region2: #{lstm_ad_forward.1} parent=1 // pred_check
      _
    $region3: #{lstm_ad_forward.1} parent=1 // pred_check_branch
      %12 = sbr.rel (0) target = $region5
    $region4: #{lstm_ad_forward.1} parent=1 // pred_region
      _
    $region5: #{lstm_ad_forward.1} parent=1 // pred_fallthru
      _
    // Predicated region
    $region6: #{lstm_ad_forward.1} parent=1 // pred_check
      _
    $region7: #{lstm_ad_forward.1} parent=1 // pred_check_branch
      %14 = sbr.rel (0) target = $region9
    $region8: #{lstm_ad_forward.1} parent=1 // pred_region
      _
    $region9: #{lstm_ad_forward.1} parent=1 // pred_fallthru
      _
    // Predicated region
    $region10: #{lstm_ad_forward.1} parent=1 // pred_check
      _
    $region11: #{lstm_ad_forward.1} parent=1 // pred_check_branch
      %16 = sbr.rel (0) target = $region13
    $region12: #{lstm_ad_forward.1} parent=1 // pred_region
      _
    $region13: #{lstm_ad_forward.1} parent=1 // pred_fallthru
      _
    // Predicated region
    $region14: #{lstm_ad_forward.1} parent=1 // pred_check
      _
    $region15: #{lstm_ad_forward.1} parent=1 // pred_check_branch
      %18 = sbr.rel (0) target = $region17
    $region16: #{lstm_ad_forward.1} parent=1 // pred_region
      _
    $region17: #{lstm_ad_forward.1} parent=1 // pred_fallthru
      _
    // Predicated region
    $region18: #{lstm_ad_forward.1} parent=1 // pred_check
      _
    $region19: #{lstm_ad_forward.1} parent=1 // pred_check_branch
      %20 = sbr.rel (0) target = $region21
    $region20: #{lstm_ad_forward.1} parent=1 // pred_region
      _
    $region21: #{lstm_ad_forward.1} parent=1 // pred_fallthru
      _
    %v21 = vld [vmem:[%s0] sm:$0xff]
    %v22 = vld [vmem:[%s1] sm:$0xff]
    %v23 = vld [vmem:[%s1 + $0x8] sm:$0xff]
    %v24 = vld [vmem:[%s1 + $0x10] sm:$0xff]
    %v25 = vld [vmem:[%s1 + $0x18] sm:$0xff]
    %v26 = vld [vmem:[%s1 + $0x20] sm:$0xff]
    %v27 = vld [vmem:[%s1 + $0x28] sm:$0xff]
    %v28 = vld [vmem:[%s1 + $0x30] sm:$0x1]
    %vm29 = vcmask 400384
    %v31 = vsel %vm29, %v21, 0
    %vm33 = vcmask 1040384
    %v35 = vsel %vm33, %v28, 0
    %37 = vmatprep.subr.mxu0 0.0
    %38 = vmatpush1.msra.mxu0 %v22
    %39 = vmatprep.subr.mxu0 0.0
    %40 = vmatpush1.msra.mxu0 %v23
    %41 = vmatprep.subr.mxu0 0.0
    %42 = vmatpush1.msra.mxu0 %v24
    %43 = vmatprep.subr.mxu0 0.0
    %44 = vmatpush1.msra.mxu0 %v25
    %45 = vmatprep.subr.mxu0 0.0
    %46 = vmatpush1.msra.mxu0 %v26
    %47 = vmatprep.subr.mxu0 0.0
    %48 = vmatpush1.msra.mxu0 %v27
    %49 = vmatprep.subr.mxu0 0.0
    %50 = vmatpush1.msra.mxu0 %v35
    %51 = vmatprep.subr.mxu0 0.0
    %52 = vmatpush1.msra.mxu0 0.0
    %53 = vmatprep.subr.mxu0 0.0
    %54 = vmatpush1.msra.mxu0 0.0
    %55 = vmatprep.subr.mxu0 0.0
    %56 = vmatpush1.msra.mxu0 0.0
    %57 = vmatprep.subr.mxu0 0.0
    %58 = vmatpush1.msra.mxu0 0.0
    %59 = vmatprep.subr.mxu0 0.0
    %60 = vmatpush1.msra.mxu0 0.0
    %61 = vmatprep.subr.mxu0 0.0
    %62 = vmatpush1.msra.mxu0 0.0
    %63 = vmatprep.subr.mxu0 0.0
    %64 = vmatpush1.msra.mxu0 0.0
    %65 = vmatprep.subr.mxu0 0.0
    %66 = vmatpush1.msra.mxu0 0.0
    %67 = vmatprep.subr.mxu0 0.0
    %68 = vmatpush1.msra.mxu0 0.0
    %69 = vmatprep.subr.mxu0 0.0
    %70 = vmatpush1.msra.mxu0 0.0
    %71 = vmatprep.subr.mxu0 0.0
    %72 = vmatpush1.msra.mxu0 0.0
    %73 = vmatprep.subr.mxu0 0.0
    %74 = vmatpush1.msra.mxu0 0.0
    %75 = vmatprep.subr.mxu0 0.0
    %76 = vmatpush1.msra.mxu0 0.0
    %77 = vmatprep.subr.mxu0 0.0
    %78 = vmatpush1.msra.mxu0 0.0
    %79 = vmatprep.subr.mxu0 0.0
    %80 = vmatpush1.msra.mxu0 0.0
    %81 = vmatprep.subr.mxu0 0.0
    %82 = vmatpush1.msra.mxu0 0.0
    %83 = vmatprep.subr.mxu0 0.0
    %84 = vmatpush1.msra.mxu0 0.0
    %85 = vmatprep.subr.mxu0 0.0
    %86 = vmatpush1.msra.mxu0 0.0
    %87 = vmatprep.subr.mxu0 0.0
    %88 = vmatpush1.msra.mxu0 0.0
    %89 = vmatprep.subr.mxu0 0.0
    %90 = vmatpush1.msra.mxu0 0.0
    %91 = vmatprep.subr.mxu0 0.0
    %92 = vmatpush1.msra.mxu0 0.0
    %93 = vmatprep.subr.mxu0 0.0
    %94 = vmatpush1.msra.mxu0 0.0
    %95 = vmatprep.subr.mxu0 0.0
    %96 = vmatpush1.msra.mxu0 0.0
    %97 = vmatprep.subr.mxu0 0.0
    %98 = vmatpush1.msra.mxu0 0.0
    %99 = vmatprep.subr.mxu0 0.0
    %100 = vmatpush1.msra.mxu0 0.0
    %101 = vmatprep.mubr.f32.mxu0 0.0
    %102 = vmatmul.mubr.f32.gmra.mrb[0].mxu0 %v31
    %v103 = vpop.f32.mrb[0].mxu0
    %v104 = vadd.f32 0.0, %v103
    %v105 = vpop.f32.mrb[0].mxu0
    %106 = vdwg.mxu0
    %v107 = vld [vmem:[%s2] sm:$0xff]
    %v108 = vld [vmem:[%s4] sm:$0x1]
    %v109 = vld [vmem:[%s4 + $0x1] sm:$0x1]
    %111 = vset.pattern.permute.xlu0 0
    %112 = vperm.xlu0 %111, %v108
    %v113 = vpop.permute.xlu0 %112
    %v115 = vmul.f32 %v113, %v107
    %116 = vset.pattern.permute.xlu0 1
    %117 = vperm.xlu0 %116, %v108
    %v118 = vpop.permute.xlu0 %117
    %v121 = vrot.slane %v107, 1
    %v123 = vmul.f32 %v118, %v121
    %124 = vset.pattern.permute.xlu0 2
    %125 = vperm.xlu0 %124, %v108
    %v126 = vpop.permute.xlu0 %125
    %v128 = vrot.slane %v107, 2
    %v130 = vmul.f32 %v126, %v128
    %131 = vset.pattern.permute.xlu0 3
    %132 = vperm.xlu0 %131, %v108
    %v133 = vpop.permute.xlu0 %132
    %v135 = vrot.slane %v107, 3
    %v137 = vmul.f32 %v133, %v135
    %138 = vset.pattern.permute.xlu0 4
    %139 = vperm.xlu0 %138, %v108
    %v140 = vpop.permute.xlu0 %139
    %v142 = vrot.slane %v107, 4
    %v144 = vmul.f32 %v140, %v142
    %145 = vset.pattern.permute.xlu0 5
    %146 = vperm.xlu0 %145, %v108
    %v147 = vpop.permute.xlu0 %146
    %v149 = vrot.slane %v107, 5
    %v151 = vmul.f32 %v147, %v149
    %152 = vset.pattern.permute.xlu0 6
    %153 = vperm.xlu0 %152, %v108
    %v154 = vpop.permute.xlu0 %153
    %v156 = vrot.slane %v107, 6
    %v158 = vmul.f32 %v154, %v156
    %159 = vset.pattern.permute.xlu0 7
    %160 = vperm.xlu0 %159, %v108
    %v161 = vpop.permute.xlu0 %160
    %v163 = vrot.slane %v107, 7
    %v165 = vmul.f32 %v161, %v163
    %v166 = vadd.f32 %v104, %v115
    %v167 = vadd.f32 %v123, %v130
    %v168 = vadd.f32 %v137, %v144
    %v169 = vadd.f32 %v151, %v158
    %v170 = vadd.f32 %v166, %v167
    %v171 = vadd.f32 %v168, %v169
    %v172 = vadd.f32 %v170, %v171
    %v173 = vadd.f32 %v172, %v165
    %v174 = vxor.u32 %v173, 2147483648
    %v175 = vmul.f32 %v174, 1.442695
    %v176 = vpow.pop %v175
    %v177 = vadd.f32 %v176, 1.0
    %v178 = vrcp.pop %v177
    %v179 = vmul.f32 1.0, %v178
    %v180 = vmul.f32 %v179, 2.0
    %v181 = vsub.f32 %v180, 1.0
    %183 = vrot.lane.b32.xlu0 %v109, 8
    %v184 = vpop.permute.xlu0 %183
    %v186 = vmul.f32 %v179, %v184
    %188 = vrot.lane.b32.xlu0 %v181, 104
    %v189 = vpop.permute.xlu0 %188
    %v191 = vmul.f32 %v179, %v189
    %193 = vrot.lane.b32.xlu0 %v191, 8
    %v194 = vpop.permute.xlu0 %193
    %v196 = vadd.f32 %v186, %v194
    %v197 = vtanh.pop %v196
    %199 = vrot.lane.b32.xlu0 %v197, 8
    %v200 = vpop.permute.xlu0 %199
    %v202 = vmul.f32 %v179, %v200
    %204 = vset.pattern.permute.xlu0 16
    %205 = vperm.xlu0 %204, %v202
    %v206 = vpop.permute.xlu0 %205
    %v208 = vmul.f32 %v206, %v107
    %209 = vset.pattern.permute.xlu0 17
    %210 = vperm.xlu0 %209, %v202
    %v211 = vpop.permute.xlu0 %210
    %v213 = vmul.f32 %v211, %v121
    %214 = vset.pattern.permute.xlu0 18
    %215 = vperm.xlu0 %214, %v202
    %v216 = vpop.permute.xlu0 %215
    %v218 = vmul.f32 %v216, %v128
    %219 = vset.pattern.permute.xlu0 19
    %220 = vperm.xlu0 %219, %v202
    %v221 = vpop.permute.xlu0 %220
    %v223 = vmul.f32 %v221, %v135
    %224 = vset.pattern.permute.xlu0 20
    %225 = vperm.xlu0 %224, %v202
    %v226 = vpop.permute.xlu0 %225
    %v228 = vmul.f32 %v226, %v142
    %229 = vset.pattern.permute.xlu0 21
    %230 = vperm.xlu0 %229, %v202
    %v231 = vpop.permute.xlu0 %230
    %v233 = vmul.f32 %v231, %v149
    %234 = vset.pattern.permute.xlu0 22
    %235 = vperm.xlu0 %234, %v202
    %v236 = vpop.permute.xlu0 %235
    %v238 = vmul.f32 %v236, %v156
    %239 = vset.pattern.permute.xlu0 23
    %240 = vperm.xlu0 %239, %v202
    %v241 = vpop.permute.xlu0 %240
    %v243 = vmul.f32 %v241, %v163
    %v245 = vrot.slane %v208, 7
    %v247 = vadd.f32 %v104, %v245
    %v248 = vadd.f32 %v213, %v218
    %v249 = vadd.f32 %v223, %v228
    %v250 = vadd.f32 %v233, %v238
    %v252 = vrot.slane %v248, 7
    %v254 = vadd.f32 %v247, %v252
    %v255 = vadd.f32 %v249, %v250
    %v257 = vrot.slane %v255, 7
    %v259 = vadd.f32 %v254, %v257
    %v261 = vrot.slane %v243, 7
    %v263 = vadd.f32 %v259, %v261
    %v264 = vxor.u32 %v263, 2147483648
    %v265 = vmul.f32 %v264, 1.442695
    %v266 = vpow.pop %v265
    %v267 = vadd.f32 %v266, 1.0
    %v268 = vrcp.pop %v267
    %v269 = vmul.f32 1.0, %v268
    %v270 = vmul.f32 %v269, 2.0
    %v271 = vsub.f32 %v270, 1.0
    %v273 = vrot.slane %v196, 7
    %v275 = vmul.f32 %v269, %v273
    %277 = vrot.lane.b32.xlu0 %v271, 104
    %v278 = vpop.permute.xlu0 %277
    %v280 = vmul.f32 %v269, %v278
    %282 = vrot.lane.b32.xlu0 %v280, 8
    %v283 = vpop.permute.xlu0 %282
    %v285 = vadd.f32 %v275, %v283
    %v286 = vtanh.pop %v285
    %288 = vrot.lane.b32.xlu0 %v286, 8
    %v289 = vpop.permute.xlu0 %288
    %v291 = vmul.f32 %v269, %v289
    %293 = vset.pattern.permute.xlu0 16
    %294 = vperm.xlu0 %293, %v291
    %v295 = vpop.permute.xlu0 %294
    %v297 = vmul.f32 %v295, %v163
    %298 = vset.pattern.permute.xlu0 17
    %299 = vperm.xlu0 %298, %v291
    %v300 = vpop.permute.xlu0 %299
    %v302 = vmul.f32 %v300, %v107
    %303 = vset.pattern.permute.xlu0 18
    %304 = vperm.xlu0 %303, %v291
    %v305 = vpop.permute.xlu0 %304
    %v307 = vmul.f32 %v305, %v121
    %308 = vset.pattern.permute.xlu0 19
    %309 = vperm.xlu0 %308, %v291
    %v310 = vpop.permute.xlu0 %309
    %v312 = vmul.f32 %v310, %v128
    %313 = vset.pattern.permute.xlu0 20
    %314 = vperm.xlu0 %313, %v291
    %v315 = vpop.permute.xlu0 %314
    %v317 = vmul.f32 %v315, %v135
    %318 = vset.pattern.permute.xlu0 21
    %319 = vperm.xlu0 %318, %v291
    %v320 = vpop.permute.xlu0 %319
    %v322 = vmul.f32 %v320, %v142
    %323 = vset.pattern.permute.xlu0 22
    %324 = vperm.xlu0 %323, %v291
    %v325 = vpop.permute.xlu0 %324
    %v327 = vmul.f32 %v325, %v149
    %328 = vset.pattern.permute.xlu0 23
    %329 = vperm.xlu0 %328, %v291
    %v330 = vpop.permute.xlu0 %329
    %v332 = vmul.f32 %v330, %v156
    %v334 = vrot.slane %v297, 7
    %v336 = vadd.f32 %v104, %v334
    %v337 = vadd.f32 %v302, %v307
    %v338 = vadd.f32 %v312, %v317
    %v339 = vadd.f32 %v322, %v327
    %v341 = vrot.slane %v337, 7
    %v343 = vadd.f32 %v336, %v341
    %v344 = vadd.f32 %v338, %v339
    %v346 = vrot.slane %v344, 7
    %v348 = vadd.f32 %v343, %v346
    %v350 = vrot.slane %v332, 7
    %v352 = vadd.f32 %v348, %v350
    %v353 = vxor.u32 %v352, 2147483648
    %v354 = vmul.f32 %v353, 1.442695
    %v355 = vpow.pop %v354
    %v356 = vadd.f32 %v355, 1.0
    %v357 = vrcp.pop %v356
    %v358 = vmul.f32 1.0, %v357
    %v359 = vmul.f32 %v358, 2.0
    %v360 = vsub.f32 %v359, 1.0
    %v362 = vrot.slane %v285, 7
    %v364 = vmul.f32 %v358, %v362
    %366 = vrot.lane.b32.xlu0 %v360, 104
    %v367 = vpop.permute.xlu0 %366
    %v369 = vmul.f32 %v358, %v367
    %371 = vrot.lane.b32.xlu0 %v369, 8
    %v372 = vpop.permute.xlu0 %371
    %v374 = vadd.f32 %v364, %v372
    %v375 = vtanh.pop %v374
    %377 = vrot.lane.b32.xlu0 %v375, 8
    %v378 = vpop.permute.xlu0 %377
    %v380 = vmul.f32 %v358, %v378
    %382 = vset.pattern.permute.xlu0 16
    %383 = vperm.xlu0 %382, %v380
    %v384 = vpop.permute.xlu0 %383
    %v386 = vmul.f32 %v384, %v156
    %387 = vset.pattern.permute.xlu0 17
    %388 = vperm.xlu0 %387, %v380
    %v389 = vpop.permute.xlu0 %388
    %v391 = vmul.f32 %v389, %v163
    %392 = vset.pattern.permute.xlu0 18
    %393 = vperm.xlu0 %392, %v380
    %v394 = vpop.permute.xlu0 %393
    %v396 = vmul.f32 %v394, %v107
    %397 = vset.pattern.permute.xlu0 19
    %398 = vperm.xlu0 %397, %v380
    %v399 = vpop.permute.xlu0 %398
    %v401 = vmul.f32 %v399, %v121
    %402 = vset.pattern.permute.xlu0 20
    %403 = vperm.xlu0 %402, %v380
    %v404 = vpop.permute.xlu0 %403
    %v406 = vmul.f32 %v404, %v128
    %407 = vset.pattern.permute.xlu0 21
    %408 = vperm.xlu0 %407, %v380
    %v409 = vpop.permute.xlu0 %408
    %v411 = vmul.f32 %v409, %v135
    %412 = vset.pattern.permute.xlu0 22
    %413 = vperm.xlu0 %412, %v380
    %v414 = vpop.permute.xlu0 %413
    %v416 = vmul.f32 %v414, %v142
    %417 = vset.pattern.permute.xlu0 23
    %418 = vperm.xlu0 %417, %v380
    %v419 = vpop.permute.xlu0 %418
    %v421 = vmul.f32 %v419, %v149
    %v423 = vrot.slane %v386, 7
    %v425 = vadd.f32 %v104, %v423
    %v426 = vadd.f32 %v391, %v396
    %v427 = vadd.f32 %v401, %v406
    %v428 = vadd.f32 %v411, %v416
    %v430 = vrot.slane %v426, 7
    %v432 = vadd.f32 %v425, %v430
    %v433 = vadd.f32 %v427, %v428
    %v435 = vrot.slane %v433, 7
    %v437 = vadd.f32 %v432, %v435
    %v439 = vrot.slane %v421, 7
    %v441 = vadd.f32 %v437, %v439
    %v442 = vxor.u32 %v441, 2147483648
    %v443 = vmul.f32 %v442, 1.442695
    %v444 = vpow.pop %v443
    %v445 = vadd.f32 %v444, 1.0
    %v446 = vrcp.pop %v445
    %v447 = vmul.f32 1.0, %v446
    %v448 = vmul.f32 %v447, 2.0
    %v449 = vsub.f32 %v448, 1.0
    %v451 = vrot.slane %v374, 7
    %v453 = vmul.f32 %v447, %v451
    %455 = vrot.lane.b32.xlu0 %v449, 104
    %v456 = vpop.permute.xlu0 %455
    %v458 = vmul.f32 %v447, %v456
    %460 = vrot.lane.b32.xlu0 %v458, 8
    %v461 = vpop.permute.xlu0 %460
    %v463 = vadd.f32 %v453, %v461
    %v464 = vtanh.pop %v463
    %466 = vrot.lane.b32.xlu0 %v464, 8
    %v467 = vpop.permute.xlu0 %466
    %v469 = vmul.f32 %v447, %v467
    %471 = vset.pattern.permute.xlu0 16
    %472 = vperm.xlu0 %471, %v469
    %v473 = vpop.permute.xlu0 %472
    %v475 = vmul.f32 %v473, %v149
    %476 = vset.pattern.permute.xlu0 17
    %477 = vperm.xlu0 %476, %v469
    %v478 = vpop.permute.xlu0 %477
    %v480 = vmul.f32 %v478, %v156
    %481 = vset.pattern.permute.xlu0 18
    %482 = vperm.xlu0 %481, %v469
    %v483 = vpop.permute.xlu0 %482
    %v485 = vmul.f32 %v483, %v163
    %486 = vset.pattern.permute.xlu0 19
    %487 = vperm.xlu0 %486, %v469
    %v488 = vpop.permute.xlu0 %487
    %v490 = vmul.f32 %v488, %v107
    %491 = vset.pattern.permute.xlu0 20
    %492 = vperm.xlu0 %491, %v469
    %v493 = vpop.permute.xlu0 %492
    %v495 = vmul.f32 %v493, %v121
    %496 = vset.pattern.permute.xlu0 21
    %497 = vperm.xlu0 %496, %v469
    %v498 = vpop.permute.xlu0 %497
    %v500 = vmul.f32 %v498, %v128
    %501 = vset.pattern.permute.xlu0 22
    %502 = vperm.xlu0 %501, %v469
    %v503 = vpop.permute.xlu0 %502
    %v505 = vmul.f32 %v503, %v135
    %506 = vset.pattern.permute.xlu0 23
    %507 = vperm.xlu0 %506, %v469
    %v508 = vpop.permute.xlu0 %507
    %v510 = vmul.f32 %v508, %v142
    %v512 = vrot.slane %v475, 7
    %v514 = vadd.f32 %v104, %v512
    %v515 = vadd.f32 %v480, %v485
    %v516 = vadd.f32 %v490, %v495
    %v517 = vadd.f32 %v500, %v505
    %v519 = vrot.slane %v515, 7
    %v521 = vadd.f32 %v514, %v519
    %v522 = vadd.f32 %v516, %v517
    %v524 = vrot.slane %v522, 7
    %v526 = vadd.f32 %v521, %v524
    %v528 = vrot.slane %v510, 7
    %v530 = vadd.f32 %v526, %v528
    %v531 = vxor.u32 %v530, 2147483648
    %v532 = vmul.f32 %v531, 1.442695
    %v533 = vpow.pop %v532
    %v534 = vadd.f32 %v533, 1.0
    %v535 = vrcp.pop %v534
    %v536 = vmul.f32 1.0, %v535
    %v537 = vmul.f32 %v536, 2.0
    %v538 = vsub.f32 %v537, 1.0
    %v540 = vrot.slane %v463, 7
    %v542 = vmul.f32 %v536, %v540
    %544 = vrot.lane.b32.xlu0 %v538, 104
    %v545 = vpop.permute.xlu0 %544
    %v547 = vmul.f32 %v536, %v545
    %549 = vrot.lane.b32.xlu0 %v547, 8
    %v550 = vpop.permute.xlu0 %549
    %v552 = vadd.f32 %v542, %v550
    %v553 = vtanh.pop %v552
    %555 = vrot.lane.b32.xlu0 %v553, 8
    %v556 = vpop.permute.xlu0 %555
    %v558 = vmul.f32 %v536, %v556
    %560 = vset.pattern.permute.xlu0 16
    %561 = vperm.xlu0 %560, %v558
    %v562 = vpop.permute.xlu0 %561
    %v564 = vmul.f32 %v562, %v142
    %565 = vset.pattern.permute.xlu0 17
    %566 = vperm.xlu0 %565, %v558
    %v567 = vpop.permute.xlu0 %566
    %v569 = vmul.f32 %v567, %v149
    %570 = vset.pattern.permute.xlu0 18
    %571 = vperm.xlu0 %570, %v558
    %v572 = vpop.permute.xlu0 %571
    %v574 = vmul.f32 %v572, %v156
    %575 = vset.pattern.permute.xlu0 19
    %576 = vperm.xlu0 %575, %v558
    %v577 = vpop.permute.xlu0 %576
    %v579 = vmul.f32 %v577, %v163
    %580 = vset.pattern.permute.xlu0 20
    %581 = vperm.xlu0 %580, %v558
    %v582 = vpop.permute.xlu0 %581
    %v584 = vmul.f32 %v582, %v107
    %585 = vset.pattern.permute.xlu0 21
    %586 = vperm.xlu0 %585, %v558
    %v587 = vpop.permute.xlu0 %586
    %v589 = vmul.f32 %v587, %v121
    %590 = vset.pattern.permute.xlu0 22
    %591 = vperm.xlu0 %590, %v558
    %v592 = vpop.permute.xlu0 %591
    %v594 = vmul.f32 %v592, %v128
    %595 = vset.pattern.permute.xlu0 23
    %596 = vperm.xlu0 %595, %v558
    %v597 = vpop.permute.xlu0 %596
    %v599 = vmul.f32 %v597, %v135
    %v601 = vrot.slane %v564, 7
    %v603 = vadd.f32 %v104, %v601
    %v604 = vadd.f32 %v569, %v574
    %v605 = vadd.f32 %v579, %v584
    %v606 = vadd.f32 %v589, %v594
    %v608 = vrot.slane %v604, 7
    %v610 = vadd.f32 %v603, %v608
    %v611 = vadd.f32 %v605, %v606
    %v613 = vrot.slane %v611, 7
    %v615 = vadd.f32 %v610, %v613
    %v617 = vrot.slane %v599, 7
    %v619 = vadd.f32 %v615, %v617
    %v620 = vxor.u32 %v619, 2147483648
    %v621 = vmul.f32 %v620, 1.442695
    %v622 = vpow.pop %v621
    %v623 = vadd.f32 %v622, 1.0
    %v624 = vrcp.pop %v623
    %v625 = vmul.f32 1.0, %v624
    %v626 = vmul.f32 %v625, 2.0
    %v627 = vsub.f32 %v626, 1.0
    %v629 = vrot.slane %v552, 7
    %v631 = vmul.f32 %v625, %v629
    %633 = vrot.lane.b32.xlu0 %v627, 104
    %v634 = vpop.permute.xlu0 %633
    %v636 = vmul.f32 %v625, %v634
    %638 = vrot.lane.b32.xlu0 %v636, 8
    %v639 = vpop.permute.xlu0 %638
    %v641 = vadd.f32 %v631, %v639
    %v642 = vtanh.pop %v641
    %644 = vrot.lane.b32.xlu0 %v642, 8
    %v645 = vpop.permute.xlu0 %644
    %v647 = vmul.f32 %v625, %v645
    %649 = vset.pattern.permute.xlu0 16
    %650 = vperm.xlu0 %649, %v647
    %v651 = vpop.permute.xlu0 %650
    %v653 = vmul.f32 %v651, %v135
    %654 = vset.pattern.permute.xlu0 17
    %655 = vperm.xlu0 %654, %v647
    %v656 = vpop.permute.xlu0 %655
    %v658 = vmul.f32 %v656, %v142
    %659 = vset.pattern.permute.xlu0 18
    %660 = vperm.xlu0 %659, %v647
    %v661 = vpop.permute.xlu0 %660
    %v663 = vmul.f32 %v661, %v149
    %664 = vset.pattern.permute.xlu0 19
    %665 = vperm.xlu0 %664, %v647
    %v666 = vpop.permute.xlu0 %665
    %v668 = vmul.f32 %v666, %v156
    %669 = vset.pattern.permute.xlu0 20
    %670 = vperm.xlu0 %669, %v647
    %v671 = vpop.permute.xlu0 %670
    %v673 = vmul.f32 %v671, %v163
    %674 = vset.pattern.permute.xlu0 21
    %675 = vperm.xlu0 %674, %v647
    %v676 = vpop.permute.xlu0 %675
    %v678 = vmul.f32 %v676, %v107
    %679 = vset.pattern.permute.xlu0 22
    %680 = vperm.xlu0 %679, %v647
    %v681 = vpop.permute.xlu0 %680
    %v683 = vmul.f32 %v681, %v121
    %684 = vset.pattern.permute.xlu0 23
    %685 = vperm.xlu0 %684, %v647
    %v686 = vpop.permute.xlu0 %685
    %v688 = vmul.f32 %v686, %v128
    %v690 = vrot.slane %v653, 7
    %v692 = vadd.f32 %v104, %v690
    %v693 = vadd.f32 %v658, %v663
    %v694 = vadd.f32 %v668, %v673
    %v695 = vadd.f32 %v678, %v683
    %v697 = vrot.slane %v693, 7
    %v699 = vadd.f32 %v692, %v697
    %v700 = vadd.f32 %v694, %v695
    %v702 = vrot.slane %v700, 7
    %v704 = vadd.f32 %v699, %v702
    %v706 = vrot.slane %v688, 7
    %v708 = vadd.f32 %v704, %v706
    %v709 = vxor.u32 %v708, 2147483648
    %v710 = vmul.f32 %v709, 1.442695
    %v711 = vpow.pop %v710
    %v712 = vadd.f32 %v711, 1.0
    %v713 = vrcp.pop %v712
    %v714 = vmul.f32 1.0, %v713
    %v715 = vmul.f32 %v714, 2.0
    %v716 = vsub.f32 %v715, 1.0
    %v718 = vrot.slane %v641, 7
    %v720 = vmul.f32 %v714, %v718
    %722 = vrot.lane.b32.xlu0 %v716, 104
    %v723 = vpop.permute.xlu0 %722
    %v725 = vmul.f32 %v714, %v723
    %727 = vrot.lane.b32.xlu0 %v725, 8
    %v728 = vpop.permute.xlu0 %727
    %v730 = vadd.f32 %v720, %v728
    %v731 = vtanh.pop %v730
    %733 = vrot.lane.b32.xlu0 %v731, 8
    %v734 = vpop.permute.xlu0 %733
    %v736 = vmul.f32 %v714, %v734
    %738 = vset.pattern.permute.xlu0 16
    %739 = vperm.xlu0 %738, %v736
    %v740 = vpop.permute.xlu0 %739
    %v742 = vmul.f32 %v740, %v128
    %743 = vset.pattern.permute.xlu0 17
    %744 = vperm.xlu0 %743, %v736
    %v745 = vpop.permute.xlu0 %744
    %v747 = vmul.f32 %v745, %v135
    %748 = vset.pattern.permute.xlu0 18
    %749 = vperm.xlu0 %748, %v736
    %v750 = vpop.permute.xlu0 %749
    %v752 = vmul.f32 %v750, %v142
    %753 = vset.pattern.permute.xlu0 19
    %754 = vperm.xlu0 %753, %v736
    %v755 = vpop.permute.xlu0 %754
    %v757 = vmul.f32 %v755, %v149
    %758 = vset.pattern.permute.xlu0 20
    %759 = vperm.xlu0 %758, %v736
    %v760 = vpop.permute.xlu0 %759
    %v762 = vmul.f32 %v760, %v156
    %763 = vset.pattern.permute.xlu0 21
    %764 = vperm.xlu0 %763, %v736
    %v765 = vpop.permute.xlu0 %764
    %v767 = vmul.f32 %v765, %v163
    %768 = vset.pattern.permute.xlu0 22
    %769 = vperm.xlu0 %768, %v736
    %v770 = vpop.permute.xlu0 %769
    %v772 = vmul.f32 %v770, %v107
    %773 = vset.pattern.permute.xlu0 23
    %774 = vperm.xlu0 %773, %v736
    %v775 = vpop.permute.xlu0 %774
    %v777 = vmul.f32 %v775, %v121
    %v779 = vrot.slane %v742, 7
    %v781 = vadd.f32 %v104, %v779
    %v782 = vadd.f32 %v747, %v752
    %v783 = vadd.f32 %v757, %v762
    %v784 = vadd.f32 %v767, %v772
    %v786 = vrot.slane %v782, 7
    %v788 = vadd.f32 %v781, %v786
    %v789 = vadd.f32 %v783, %v784
    %v791 = vrot.slane %v789, 7
    %v793 = vadd.f32 %v788, %v791
    %v795 = vrot.slane %v777, 7
    %v797 = vadd.f32 %v793, %v795
    %v798 = vxor.u32 %v797, 2147483648
    %v799 = vmul.f32 %v798, 1.442695
    %v800 = vpow.pop %v799
    %v801 = vadd.f32 %v800, 1.0
    %v802 = vrcp.pop %v801
    %v803 = vmul.f32 1.0, %v802
    %v804 = vmul.f32 %v803, 2.0
    %v805 = vsub.f32 %v804, 1.0
    %v807 = vrot.slane %v730, 7
    %v809 = vmul.f32 %v803, %v807
    %811 = vrot.lane.b32.xlu0 %v805, 104
    %v812 = vpop.permute.xlu0 %811
    %v814 = vmul.f32 %v803, %v812
    %816 = vrot.lane.b32.xlu0 %v814, 8
    %v817 = vpop.permute.xlu0 %816
    %v819 = vadd.f32 %v809, %v817
    %v820 = vtanh.pop %v819
    %822 = vrot.lane.b32.xlu0 %v820, 8
    %v823 = vpop.permute.xlu0 %822
    %v825 = vmul.f32 %v803, %v823
    %v826 = vsel %vm33, %v202, %v291
    %vm827 = vcmask 1041408
    %v828 = vsel %vm827, %v826, %v380
    %vm829 = vcmask 1042432
    %v830 = vsel %vm829, %v828, %v469
    %vm831 = vcmask 1043456
    %v832 = vsel %vm831, %v830, %v558
    %vm833 = vcmask 1044480
    %v834 = vsel %vm833, %v832, %v647
    %vm835 = vcmask 1045504
    %v836 = vsel %vm835, %v834, %v736
    %vm837 = vcmask 1046528
    %v838 = vsel %vm837, %v836, %v825
    %v839 = vld [vmem:[%s3] sm:$0xff]
    %v840 = vld [vmem:[%s3 + $0x8] sm:$0x1]
    %v841 = vlaneseq
    %v842 = vshrl.u32 %v841, 7
    %v843 = vsub.s32 0, %v842
    %v844 = vrot.slane %v840, %v843
    %846 = vrot.lane.b32.xlu0 %v838, 112
    %v847 = vpop.permute.xlu0 %846
    %vm848 = vcmask 64512
    %v849 = vsel %vm848, %v847, 0
    %851 = vmatprep.subr.mxu0 0.0
    %852 = vmatpush1.msra.mxu0 %v839
    %853 = vmatprep.subr.mxu0 0.0
    %854 = vmatpush1.msra.mxu0 0.0
    %855 = vmatprep.subr.mxu0 0.0
    %856 = vmatpush1.msra.mxu0 0.0
    %857 = vmatprep.subr.mxu0 0.0
    %858 = vmatpush1.msra.mxu0 0.0
    %859 = vmatprep.subr.mxu0 0.0
    %860 = vmatpush1.msra.mxu0 0.0
    %861 = vmatprep.subr.mxu0 0.0
    %862 = vmatpush1.msra.mxu0 0.0
    %863 = vmatprep.subr.mxu0 0.0
    %864 = vmatpush1.msra.mxu0 0.0
    %865 = vmatprep.subr.mxu0 0.0
    %866 = vmatpush1.msra.mxu0 0.0
    %867 = vmatprep.subr.mxu0 0.0
    %868 = vmatpush1.msra.mxu0 0.0
    %869 = vmatprep.subr.mxu0 0.0
    %870 = vmatpush1.msra.mxu0 0.0
    %871 = vmatprep.subr.mxu0 0.0
    %872 = vmatpush1.msra.mxu0 0.0
    %873 = vmatprep.subr.mxu0 0.0
    %874 = vmatpush1.msra.mxu0 0.0
    %875 = vmatprep.subr.mxu0 0.0
    %876 = vmatpush1.msra.mxu0 0.0
    %877 = vmatprep.subr.mxu0 0.0
    %878 = vmatpush1.msra.mxu0 0.0
    %879 = vmatprep.subr.mxu0 0.0
    %880 = vmatpush1.msra.mxu0 0.0
    %881 = vmatprep.subr.mxu0 0.0
    %882 = vmatpush1.msra.mxu0 0.0
    %883 = vmatprep.subr.mxu0 0.0
    %884 = vmatpush1.msra.mxu0 0.0
    %885 = vmatprep.subr.mxu0 0.0
    %886 = vmatpush1.msra.mxu0 0.0
    %887 = vmatprep.subr.mxu0 0.0
    %888 = vmatpush1.msra.mxu0 0.0
    %889 = vmatprep.subr.mxu0 0.0
    %890 = vmatpush1.msra.mxu0 0.0
    %891 = vmatprep.subr.mxu0 0.0
    %892 = vmatpush1.msra.mxu0 0.0
    %893 = vmatprep.subr.mxu0 0.0
    %894 = vmatpush1.msra.mxu0 0.0
    %895 = vmatprep.subr.mxu0 0.0
    %896 = vmatpush1.msra.mxu0 0.0
    %897 = vmatprep.subr.mxu0 0.0
    %898 = vmatpush1.msra.mxu0 0.0
    %899 = vmatprep.subr.mxu0 0.0
    %900 = vmatpush1.msra.mxu0 0.0
    %901 = vmatprep.subr.mxu0 0.0
    %902 = vmatpush1.msra.mxu0 0.0
    %903 = vmatprep.subr.mxu0 0.0
    %904 = vmatpush1.msra.mxu0 0.0
    %905 = vmatprep.subr.mxu0 0.0
    %906 = vmatpush1.msra.mxu0 0.0
    %907 = vmatprep.subr.mxu0 0.0
    %908 = vmatpush1.msra.mxu0 0.0
    %909 = vmatprep.subr.mxu0 0.0
    %910 = vmatpush1.msra.mxu0 0.0
    %911 = vmatprep.subr.mxu0 0.0
    %912 = vmatpush1.msra.mxu0 0.0
    %913 = vmatprep.subr.mxu0 0.0
    %914 = vmatpush1.msra.mxu0 0.0
    %915 = vmatprep.mubr.f32.mxu0 0.0
    %916 = vmatmul.mubr.f32.gmra.mrb[0].mxu0 %v849
    %v917 = vpop.f32.mrb[0].mxu0
    %v918 = vadd.f32 %v844, %v917
    %v919 = vpop.f32.mrb[0].mxu0
    %920 = vdwg.mxu0
    %v921 = vxor.u32 %v918, 2147483648
    %v922 = vmul.f32 %v921, 1.442695
    %v923 = vpow.pop %v922
    %v924 = vadd.f32 %v923, 1.0
    %v925 = vrcp.pop %v924
    %v926 = vmul.f32 1.0, %v925
    %927 = vst [vmem:[#allocation2] sm:$0xff] %v926
    // Predicated region
    $region22: #{lstm_ad_forward.1} parent=1 // pred_check
      _
    $region23: #{lstm_ad_forward.1} parent=1 // pred_check_branch
      %929 = sbr.rel (0) target = $region25
    $region24: #{lstm_ad_forward.1} parent=1 // pred_region
      %s931 = ssub.s32 128, 128
      %932 = vsyncadd [#allocation3], %s931
      %s934 = sshll.u32 [#allocation2], 4
      %s935 = int_to_ptr.vmem [resolvable:$true] %s934
      %937 = dma.vmem_to_hbm [thread:$0]  %s935, 128, %s5, [#allocation3]
    $region25: #{lstm_ad_forward.1} parent=1 // pred_fallthru
      _
    // Predicated region
    $region26: #{lstm_ad_forward.1} parent=1 // pred_check
      _
    $region27: #{lstm_ad_forward.1} parent=1 // pred_check_branch
      %939 = sbr.rel (0) target = $region29
    $region28: #{lstm_ad_forward.1} parent=1 // pred_region
      %940 = dma.done [#allocation3], 128
    $region29: #{lstm_ad_forward.1} parent=1 // pred_fallthru
      _
    %941 = vsyncpa [#allocation3], 1

</llo_original>
